<compile_context>
chip_gen: v7x
topology: tpu7x:2x2x1
jax: 0.10.0
libtpu: 0.0.40
codegen_flags: <defaults>
</compile_context>

<pallas_src>
import jax
import jax.numpy as jnp
from jax import lax
from jax.experimental import pallas as pl
from jax.experimental.pallas import tpu as pltpu


def _block_kernel(x_ref, m1_ref, b1_ref, m2_ref, b2_ref, m3_ref, b3_ref, out_ref):
    # x_ref / out_ref : (H, W*C)   lane-dense activation slab (batch dim squeezed)
    # mK_ref          : (3, W*C, W*C)  banded conv matrices, one per kernel row ky
    # bK_ref          : (1, W*C)       lane-tiled bias row
    H = out_ref.shape[0]
    x = x_ref[...]                                     # (H, WC)

    # Constant +/-1 row-shift operators (dy taps), applied on the MXU.
    # (s_dn @ a)[h] = a[h-1] (zero at h=0); (s_up @ a)[h] = a[h+1] (zero at h=H-1).
    r = lax.broadcasted_iota(jnp.int32, (H, H), 0)
    c = lax.broadcasted_iota(jnp.int32, (H, H), 1)
    s_dn = (c == r - 1).astype(jnp.float32)
    s_up = (c == r + 1).astype(jnp.float32)

    def conv3x3(a, m_ref, b_ref):
        # One banded matmul per kernel row; dx taps + channel mixing + zero
        # padding along W are folded into the (WC, WC) matrices.
        acc = jnp.dot(a, m_ref[1], preferred_element_type=jnp.float32)          # ky=1 (same row)
        acc += jnp.dot(jnp.dot(s_dn, a, preferred_element_type=jnp.float32),
                       m_ref[0], preferred_element_type=jnp.float32)            # ky=0 (row h-1)
        acc += jnp.dot(jnp.dot(s_up, a, preferred_element_type=jnp.float32),
                       m_ref[2], preferred_element_type=jnp.float32)            # ky=2 (row h+1)
        return acc + b_ref[...]                                                  # (1, WC) broadcast

    def leaky(v):
        return jnp.where(v > 0, v, 0.1 * v)

    y = leaky(conv3x3(x, m1_ref, b1_ref))
    y = leaky(conv3x3(y, m2_ref, b2_ref))
    y = conv3x3(y, m3_ref, b3_ref)            # Dropout(0.2): eval-mode identity
    out_ref[...] = jnp.maximum(y + x, 0.0).astype(out_ref.dtype)   # residual + ReLU


def block_forward(x_nchw, packed):
    """x_nchw: (N, C, H, W) float32.  packed: output of pack_params()."""
    x = jnp.transpose(x_nchw, (0, 2, 3, 1))            # NHWC
    N, H, W, C = x.shape
    WC = W * C
    x_r = x.reshape(N, H, WC)                          # lane-dense activation layout

    out = pl.pallas_call(
        _block_kernel,
        out_shape=jax.ShapeDtypeStruct((N, H, WC), jnp.float32),
        grid=(N,),
        in_specs=[
            pl.BlockSpec((None, H, WC), lambda b: (b, 0, 0)),   # x (batch squeezed)
            pl.BlockSpec((3, WC, WC), lambda b: (0, 0, 0)),     # m1 (fetched once)
            pl.BlockSpec((1, WC), lambda b: (0, 0)),            # bias1
            pl.BlockSpec((3, WC, WC), lambda b: (0, 0, 0)),     # m2
            pl.BlockSpec((1, WC), lambda b: (0, 0)),            # bias2
            pl.BlockSpec((3, WC, WC), lambda b: (0, 0, 0)),     # m3
            pl.BlockSpec((1, WC), lambda b: (0, 0)),            # bias3
        ],
        out_specs=pl.BlockSpec((None, H, WC), lambda b: (b, 0, 0)),
        compiler_params=pltpu.CompilerParams(
            dimension_semantics=("parallel",)),                 # N=2 -> both v7x cores busy
    )(x_r, packed["m1"], packed["bias1"], packed["m2"], packed["bias2"],
      packed["m3"], packed["bias3"])

    return jnp.transpose(out.reshape(N, H, W, C), (0, 3, 1, 2))   # back to NCHW


# ---------------------------------------------------------------------------
# Weight packing (hoisted out of the kernel, done once per parameter set).
# ---------------------------------------------------------------------------

def _band_matrices(w_oihw, W):
    """(Cout, Cin, 3, 3) PyTorch conv weight -> (3, W*Cin, W*Cout) banded matrices.

    M[ky][wp*Cin + ci, w*Cout + co] = w[ky, kx=wp-w+1, ci, co] for |wp-w| <= 1,
    else 0.  Multiplying an activation row in (W*Cin,) layout by M[ky] applies
    all dx taps + channel mixing + SAME zero-padding along W for kernel row ky.
    """
    Cout, Cin, KH, KW = w_oihw.shape
    w_hwio = jnp.transpose(w_oihw, (2, 3, 1, 0)).astype(jnp.float32)   # (KH,KW,Cin,Cout)
    wp = jnp.arange(W)[:, None]            # source column (rows of M)
    wo = jnp.arange(W)[None, :]            # output column (cols of M)
    kx = wp - wo + 1                       # (W, W) dx tap index
    valid = ((kx >= 0) & (kx < KW)).astype(jnp.float32)[:, :, None, None]
    kx_c = jnp.clip(kx, 0, KW - 1)
    mats = []
    for ky in range(KH):
        blocks = w_hwio[ky][kx_c] * valid                              # (W, W, Cin, Cout)
        mats.append(jnp.transpose(blocks, (0, 2, 1, 3)).reshape(W * Cin, W * Cout))
    return jnp.stack(mats, axis=0)                                     # (3, W*Cin, W*Cout)


def init_params(key, size):
    """Raw parameters in PyTorch layout: wK (Cout, Cin, 3, 3), bK (C,)."""
    params = {}
    for i in (1, 2, 3):
        key, kw, kb = jax.random.split(key, 3)
        params[f"w{i}"] = jax.random.normal(kw, (size, size, 3, 3), jnp.float32) * 0.1
        params[f"b{i}"] = jax.random.normal(kb, (size,), jnp.float32) * 0.01
    return params


def pack_params(params, W):
    """Kernel-ready packing: banded matmul weights + lane-tiled bias rows."""
    packed = {}
    for i in (1, 2, 3):
        packed[f"m{i}"] = _band_matrices(params[f"w{i}"], W)           # (3, W*C, W*C)
        packed[f"bias{i}"] = jnp.tile(params[f"b{i}"], W).reshape(1, -1)  # (1, W*C)
    return packed


# ---------------------------------------------------------------------------
# Pure-JAX reference (lax.conv) for correctness checking.
# ---------------------------------------------------------------------------

def _reference_forward(x_nchw, params):
    x = jnp.transpose(x_nchw, (0, 2, 3, 1))  # NHWC
    C = x.shape[-1]

    def conv(v, w_oihw, b):
        w = jnp.transpose(w_oihw, (2, 3, 1, 0))        # HWIO
        o = lax.conv_general_dilated(
            v, w, window_strides=(1, 1), padding="SAME",
            dimension_numbers=("NHWC", "HWIO", "NHWC"))
        return o + b.reshape(1, 1, 1, C)

    y = conv(x, params["w1"], params["b1"])
    y = jnp.where(y > 0, y, 0.1 * y)
    y = conv(y, params["w2"], params["b2"])
    y = jnp.where(y > 0, y, 0.1 * y)
    y = conv(y, params["w3"], params["b3"])
    z = jnp.maximum(y + x, 0.0)
    return jnp.transpose(z, (0, 3, 1, 2))


if __name__ == "__main__":
    size = 8            # channels  (W*C = 16*8 = 128 -> exactly one lane-dense tile)
    N, H, W = 2, 16, 16

    key = jax.random.PRNGKey(0)
    key, kx = jax.random.split(key)
    x = jax.random.normal(kx, (N, size, H, W), jnp.float32)   # NCHW, like PyTorch

    params = init_params(key, size)
    packed = pack_params(params, W)

    out = jax.block_until_ready(block_forward(x, packed))
    ref = jax.block_until_ready(_reference_forward(x, params))

    assert out.shape == (N, size, H, W)
    assert jnp.allclose(out, ref, atol=1e-4, rtol=1e-4), (
        float(jnp.max(jnp.abs(out - ref))))
    print("KERNEL_OK")
</pallas_src>

<mosaic_0001>
module attributes {stable_mosaic.version = 11 : i64} {
  func.func @_block_kernel(%arg0: i32, %arg1: memref<1x16x128xf32, #tpu.memory_space<vmem>>, %arg2: memref<3x128x128xf32, #tpu.memory_space<vmem>>, %arg3: memref<1x128xf32, #tpu.memory_space<vmem>>, %arg4: memref<3x128x128xf32, #tpu.memory_space<vmem>>, %arg5: memref<1x128xf32, #tpu.memory_space<vmem>>, %arg6: memref<3x128x128xf32, #tpu.memory_space<vmem>>, %arg7: memref<1x128xf32, #tpu.memory_space<vmem>>, %arg8: memref<1x16x128xf32, #tpu.memory_space<vmem>>) attributes {dimension_semantics = [#tpu.dimension_semantics<parallel>], iteration_bounds = array<i64: 2>, scalar_prefetch = 0 : i64, scratch_operands = 0 : i64, tpu.core_type = #tpu.core_type<tc>, window_params = [{transform_indices = @transform_0, window_bounds = array<i64: 1, 16, 128>}, {pipeline_mode = #tpu.pipeline_mode<synchronous>, transform_indices = @transform_1, window_bounds = array<i64: 3, 128, 128>}, {pipeline_mode = #tpu.pipeline_mode<synchronous>, transform_indices = @transform_2, window_bounds = array<i64: 1, 128>}, {pipeline_mode = #tpu.pipeline_mode<synchronous>, transform_indices = @transform_3, window_bounds = array<i64: 3, 128, 128>}, {pipeline_mode = #tpu.pipeline_mode<synchronous>, transform_indices = @transform_4, window_bounds = array<i64: 1, 128>}, {pipeline_mode = #tpu.pipeline_mode<synchronous>, transform_indices = @transform_5, window_bounds = array<i64: 3, 128, 128>}, {pipeline_mode = #tpu.pipeline_mode<synchronous>, transform_indices = @transform_6, window_bounds = array<i64: 1, 128>}, {transform_indices = @transform_7, window_bounds = array<i64: 1, 16, 128>}]} {
    %c0 = arith.constant 0 : index
    %c0_0 = arith.constant 0 : index
    %c0_1 = arith.constant 0 : index
    %0 = vector.load %arg1[%c0, %c0_0, %c0_1] : memref<1x16x128xf32, #tpu.memory_space<vmem>>, vector<1x16x128xf32>
    %1 = vector.shape_cast %0 : vector<1x16x128xf32> to vector<16x128xf32>
    %2 = tpu.iota {dimensions = array<i32: 0>} : vector<16x16xi32>
    %3 = tpu.iota {dimensions = array<i32: 1>} : vector<16x16xi32>
    %c1_i32 = arith.constant 1 : i32
    %4 = vector.broadcast %c1_i32 : i32 to vector<16x16xi32>
    %5 = arith.subi %2, %4 : vector<16x16xi32>
    %6 = arith.cmpi eq, %3, %5 : vector<16x16xi32>
    %7 = arith.extui %6 : vector<16x16xi1> to vector<16x16xi32>
    %8 = arith.sitofp %7 : vector<16x16xi32> to vector<16x16xf32>
    %c1_i32_2 = arith.constant 1 : i32
    %9 = vector.broadcast %c1_i32_2 : i32 to vector<16x16xi32>
    %10 = arith.addi %2, %9 : vector<16x16xi32>
    %11 = arith.cmpi eq, %3, %10 : vector<16x16xi32>
    %12 = arith.extui %11 : vector<16x16xi1> to vector<16x16xi32>
    %13 = arith.sitofp %12 : vector<16x16xi32> to vector<16x16xf32>
    %c1 = arith.constant 1 : index
    %c0_3 = arith.constant 0 : index
    %c0_4 = arith.constant 0 : index
    %14 = vector.load %arg2[%c1, %c0_3, %c0_4] : memref<3x128x128xf32, #tpu.memory_space<vmem>>, vector<1x128x128xf32>
    %15 = vector.shape_cast %14 : vector<1x128x128xf32> to vector<128x128xf32>
    %cst = arith.constant dense<0.000000e+00> : vector<16x128xf32>
    %16 = tpu.matmul %1, %15, %cst {dimension_numbers = #tpu.dot_dimension_numbers<[1], [0], [0], [1], [0, 0, 1, 1], [], []>} : vector<16x128xf32>, vector<128x128xf32>, vector<16x128xf32> -> vector<16x128xf32>
    %cst_5 = arith.constant dense<0.000000e+00> : vector<16x128xf32>
    %17 = tpu.matmul %8, %1, %cst_5 {dimension_numbers = #tpu.dot_dimension_numbers<[1], [0], [0], [1], [0, 0, 1, 1], [], []>} : vector<16x16xf32>, vector<16x128xf32>, vector<16x128xf32> -> vector<16x128xf32>
    %c0_6 = arith.constant 0 : index
    %c0_7 = arith.constant 0 : index
    %c0_8 = arith.constant 0 : index
    %18 = vector.load %arg2[%c0_6, %c0_7, %c0_8] : memref<3x128x128xf32, #tpu.memory_space<vmem>>, vector<1x128x128xf32>
    %19 = vector.shape_cast %18 : vector<1x128x128xf32> to vector<128x128xf32>
    %cst_9 = arith.constant dense<0.000000e+00> : vector<16x128xf32>
    %20 = tpu.matmul %17, %19, %cst_9 {dimension_numbers = #tpu.dot_dimension_numbers<[1], [0], [0], [1], [0, 0, 1, 1], [], []>} : vector<16x128xf32>, vector<128x128xf32>, vector<16x128xf32> -> vector<16x128xf32>
    %21 = arith.addf %16, %20 : vector<16x128xf32>
    %cst_10 = arith.constant dense<0.000000e+00> : vector<16x128xf32>
    %22 = tpu.matmul %13, %1, %cst_10 {dimension_numbers = #tpu.dot_dimension_numbers<[1], [0], [0], [1], [0, 0, 1, 1], [], []>} : vector<16x16xf32>, vector<16x128xf32>, vector<16x128xf32> -> vector<16x128xf32>
    %c2 = arith.constant 2 : index
    %c0_11 = arith.constant 0 : index
    %c0_12 = arith.constant 0 : index
    %23 = vector.load %arg2[%c2, %c0_11, %c0_12] : memref<3x128x128xf32, #tpu.memory_space<vmem>>, vector<1x128x128xf32>
    %24 = vector.shape_cast %23 : vector<1x128x128xf32> to vector<128x128xf32>
    %cst_13 = arith.constant dense<0.000000e+00> : vector<16x128xf32>
    %25 = tpu.matmul %22, %24, %cst_13 {dimension_numbers = #tpu.dot_dimension_numbers<[1], [0], [0], [1], [0, 0, 1, 1], [], []>} : vector<16x128xf32>, vector<128x128xf32>, vector<16x128xf32> -> vector<16x128xf32>
    %26 = arith.addf %21, %25 : vector<16x128xf32>
    %c0_14 = arith.constant 0 : index
    %c0_15 = arith.constant 0 : index
    %27 = vector.load %arg3[%c0_14, %c0_15] : memref<1x128xf32, #tpu.memory_space<vmem>>, vector<1x128xf32>
    %28 = vector.broadcast %27 : vector<1x128xf32> to vector<16x128xf32>
    %29 = arith.addf %26, %28 : vector<16x128xf32>
    %cst_16 = arith.constant 0.000000e+00 : f32
    %30 = vector.broadcast %cst_16 : f32 to vector<16x128xf32>
    %31 = arith.cmpf ogt, %29, %30 : vector<16x128xf32>
    %cst_17 = arith.constant 1.000000e-01 : f32
    %32 = vector.broadcast %cst_17 : f32 to vector<16x128xf32>
    %33 = arith.mulf %32, %29 : vector<16x128xf32>
    %34 = arith.select %31, %29, %33 : vector<16x128xi1>, vector<16x128xf32>
    %c1_18 = arith.constant 1 : index
    %c0_19 = arith.constant 0 : index
    %c0_20 = arith.constant 0 : index
    %35 = vector.load %arg4[%c1_18, %c0_19, %c0_20] : memref<3x128x128xf32, #tpu.memory_space<vmem>>, vector<1x128x128xf32>
    %36 = vector.shape_cast %35 : vector<1x128x128xf32> to vector<128x128xf32>
    %cst_21 = arith.constant dense<0.000000e+00> : vector<16x128xf32>
    %37 = tpu.matmul %34, %36, %cst_21 {dimension_numbers = #tpu.dot_dimension_numbers<[1], [0], [0], [1], [0, 0, 1, 1], [], []>} : vector<16x128xf32>, vector<128x128xf32>, vector<16x128xf32> -> vector<16x128xf32>
    %cst_22 = arith.constant dense<0.000000e+00> : vector<16x128xf32>
    %38 = tpu.matmul %8, %34, %cst_22 {dimension_numbers = #tpu.dot_dimension_numbers<[1], [0], [0], [1], [0, 0, 1, 1], [], []>} : vector<16x16xf32>, vector<16x128xf32>, vector<16x128xf32> -> vector<16x128xf32>
    %c0_23 = arith.constant 0 : index
    %c0_24 = arith.constant 0 : index
    %c0_25 = arith.constant 0 : index
    %39 = vector.load %arg4[%c0_23, %c0_24, %c0_25] : memref<3x128x128xf32, #tpu.memory_space<vmem>>, vector<1x128x128xf32>
    %40 = vector.shape_cast %39 : vector<1x128x128xf32> to vector<128x128xf32>
    %cst_26 = arith.constant dense<0.000000e+00> : vector<16x128xf32>
    %41 = tpu.matmul %38, %40, %cst_26 {dimension_numbers = #tpu.dot_dimension_numbers<[1], [0], [0], [1], [0, 0, 1, 1], [], []>} : vector<16x128xf32>, vector<128x128xf32>, vector<16x128xf32> -> vector<16x128xf32>
    %42 = arith.addf %37, %41 : vector<16x128xf32>
    %cst_27 = arith.constant dense<0.000000e+00> : vector<16x128xf32>
    %43 = tpu.matmul %13, %34, %cst_27 {dimension_numbers = #tpu.dot_dimension_numbers<[1], [0], [0], [1], [0, 0, 1, 1], [], []>} : vector<16x16xf32>, vector<16x128xf32>, vector<16x128xf32> -> vector<16x128xf32>
    %c2_28 = arith.constant 2 : index
    %c0_29 = arith.constant 0 : index
    %c0_30 = arith.constant 0 : index
    %44 = vector.load %arg4[%c2_28, %c0_29, %c0_30] : memref<3x128x128xf32, #tpu.memory_space<vmem>>, vector<1x128x128xf32>
    %45 = vector.shape_cast %44 : vector<1x128x128xf32> to vector<128x128xf32>
    %cst_31 = arith.constant dense<0.000000e+00> : vector<16x128xf32>
    %46 = tpu.matmul %43, %45, %cst_31 {dimension_numbers = #tpu.dot_dimension_numbers<[1], [0], [0], [1], [0, 0, 1, 1], [], []>} : vector<16x128xf32>, vector<128x128xf32>, vector<16x128xf32> -> vector<16x128xf32>
    %47 = arith.addf %42, %46 : vector<16x128xf32>
    %c0_32 = arith.constant 0 : index
    %c0_33 = arith.constant 0 : index
    %48 = vector.load %arg5[%c0_32, %c0_33] : memref<1x128xf32, #tpu.memory_space<vmem>>, vector<1x128xf32>
    %49 = vector.broadcast %48 : vector<1x128xf32> to vector<16x128xf32>
    %50 = arith.addf %47, %49 : vector<16x128xf32>
    %cst_34 = arith.constant 0.000000e+00 : f32
    %51 = vector.broadcast %cst_34 : f32 to vector<16x128xf32>
    %52 = arith.cmpf ogt, %50, %51 : vector<16x128xf32>
    %cst_35 = arith.constant 1.000000e-01 : f32
    %53 = vector.broadcast %cst_35 : f32 to vector<16x128xf32>
    %54 = arith.mulf %53, %50 : vector<16x128xf32>
    %55 = arith.select %52, %50, %54 : vector<16x128xi1>, vector<16x128xf32>
    %c1_36 = arith.constant 1 : index
    %c0_37 = arith.constant 0 : index
    %c0_38 = arith.constant 0 : index
    %56 = vector.load %arg6[%c1_36, %c0_37, %c0_38] : memref<3x128x128xf32, #tpu.memory_space<vmem>>, vector<1x128x128xf32>
    %57 = vector.shape_cast %56 : vector<1x128x128xf32> to vector<128x128xf32>
    %cst_39 = arith.constant dense<0.000000e+00> : vector<16x128xf32>
    %58 = tpu.matmul %55, %57, %cst_39 {dimension_numbers = #tpu.dot_dimension_numbers<[1], [0], [0], [1], [0, 0, 1, 1], [], []>} : vector<16x128xf32>, vector<128x128xf32>, vector<16x128xf32> -> vector<16x128xf32>
    %cst_40 = arith.constant dense<0.000000e+00> : vector<16x128xf32>
    %59 = tpu.matmul %8, %55, %cst_40 {dimension_numbers = #tpu.dot_dimension_numbers<[1], [0], [0], [1], [0, 0, 1, 1], [], []>} : vector<16x16xf32>, vector<16x128xf32>, vector<16x128xf32> -> vector<16x128xf32>
    %c0_41 = arith.constant 0 : index
    %c0_42 = arith.constant 0 : index
    %c0_43 = arith.constant 0 : index
    %60 = vector.load %arg6[%c0_41, %c0_42, %c0_43] : memref<3x128x128xf32, #tpu.memory_space<vmem>>, vector<1x128x128xf32>
    %61 = vector.shape_cast %60 : vector<1x128x128xf32> to vector<128x128xf32>
    %cst_44 = arith.constant dense<0.000000e+00> : vector<16x128xf32>
    %62 = tpu.matmul %59, %61, %cst_44 {dimension_numbers = #tpu.dot_dimension_numbers<[1], [0], [0], [1], [0, 0, 1, 1], [], []>} : vector<16x128xf32>, vector<128x128xf32>, vector<16x128xf32> -> vector<16x128xf32>
    %63 = arith.addf %58, %62 : vector<16x128xf32>
    %cst_45 = arith.constant dense<0.000000e+00> : vector<16x128xf32>
    %64 = tpu.matmul %13, %55, %cst_45 {dimension_numbers = #tpu.dot_dimension_numbers<[1], [0], [0], [1], [0, 0, 1, 1], [], []>} : vector<16x16xf32>, vector<16x128xf32>, vector<16x128xf32> -> vector<16x128xf32>
    %c2_46 = arith.constant 2 : index
    %c0_47 = arith.constant 0 : index
    %c0_48 = arith.constant 0 : index
    %65 = vector.load %arg6[%c2_46, %c0_47, %c0_48] : memref<3x128x128xf32, #tpu.memory_space<vmem>>, vector<1x128x128xf32>
    %66 = vector.shape_cast %65 : vector<1x128x128xf32> to vector<128x128xf32>
    %cst_49 = arith.constant dense<0.000000e+00> : vector<16x128xf32>
    %67 = tpu.matmul %64, %66, %cst_49 {dimension_numbers = #tpu.dot_dimension_numbers<[1], [0], [0], [1], [0, 0, 1, 1], [], []>} : vector<16x128xf32>, vector<128x128xf32>, vector<16x128xf32> -> vector<16x128xf32>
    %68 = arith.addf %63, %67 : vector<16x128xf32>
    %c0_50 = arith.constant 0 : index
    %c0_51 = arith.constant 0 : index
    %69 = vector.load %arg7[%c0_50, %c0_51] : memref<1x128xf32, #tpu.memory_space<vmem>>, vector<1x128xf32>
    %70 = vector.broadcast %69 : vector<1x128xf32> to vector<16x128xf32>
    %71 = arith.addf %68, %70 : vector<16x128xf32>
    %72 = arith.addf %71, %1 : vector<16x128xf32>
    %cst_52 = arith.constant 0.000000e+00 : f32
    %73 = vector.broadcast %cst_52 : f32 to vector<16x128xf32>
    %74 = arith.maximumf %72, %73 : vector<16x128xf32>
    %c0_53 = arith.constant 0 : index
    %c0_54 = arith.constant 0 : index
    %c0_55 = arith.constant 0 : index
    %75 = vector.load %arg8[%c0_53, %c0_54, %c0_55] : memref<1x16x128xf32, #tpu.memory_space<vmem>>, vector<1x16x128xf32>
    %76 = vector.shape_cast %75 : vector<1x16x128xf32> to vector<16x128xf32>
    %77 = vector.shape_cast %74 : vector<16x128xf32> to vector<1x16x128xf32>
    tpu.vector_store %arg8[%c0_53, %c0_54, %c0_55], %77 {strides = array<i32>} : memref<1x16x128xf32, #tpu.memory_space<vmem>>, vector<1x16x128xf32>,
    return
  }
  func.func @transform_0(%arg0: i32) -> (i32, i32, i32) {
    %c0_i32 = arith.constant 0 : i32
    %c0_i32_0 = arith.constant 0 : i32
    %c0_i32_1 = arith.constant 0 : i32
    return %arg0, %c0_i32, %c0_i32_0 : i32, i32, i32
  }
  func.func @transform_1(%arg0: i32) -> (i32, i32, i32) {
    %c0_i32 = arith.constant 0 : i32
    %c0_i32_0 = arith.constant 0 : i32
    %c0_i32_1 = arith.constant 0 : i32
    %c0_i32_2 = arith.constant 0 : i32
    return %c0_i32, %c0_i32_0, %c0_i32_1 : i32, i32, i32
  }
  func.func @transform_2(%arg0: i32) -> (i32, i32) {
    %c0_i32 = arith.constant 0 : i32
    %c0_i32_0 = arith.constant 0 : i32
    %c0_i32_1 = arith.constant 0 : i32
    return %c0_i32, %c0_i32_0 : i32, i32
  }
  func.func @transform_3(%arg0: i32) -> (i32, i32, i32) {
    %c0_i32 = arith.constant 0 : i32
    %c0_i32_0 = arith.constant 0 : i32
    %c0_i32_1 = arith.constant 0 : i32
    %c0_i32_2 = arith.constant 0 : i32
    return %c0_i32, %c0_i32_0, %c0_i32_1 : i32, i32, i32
  }
  func.func @transform_4(%arg0: i32) -> (i32, i32) {
    %c0_i32 = arith.constant 0 : i32
    %c0_i32_0 = arith.constant 0 : i32
    %c0_i32_1 = arith.constant 0 : i32
    return %c0_i32, %c0_i32_0 : i32, i32
  }
  func.func @transform_5(%arg0: i32) -> (i32, i32, i32) {
    %c0_i32 = arith.constant 0 : i32
    %c0_i32_0 = arith.constant 0 : i32
    %c0_i32_1 = arith.constant 0 : i32
    %c0_i32_2 = arith.constant 0 : i32
    return %c0_i32, %c0_i32_0, %c0_i32_1 : i32, i32, i32
  }
  func.func @transform_6(%arg0: i32) -> (i32, i32) {
    %c0_i32 = arith.constant 0 : i32
    %c0_i32_0 = arith.constant 0 : i32
    %c0_i32_1 = arith.constant 0 : i32
    return %c0_i32, %c0_i32_0 : i32, i32
  }
  func.func @transform_7(%arg0: i32) -> (i32, i32, i32) {
    %c0_i32 = arith.constant 0 : i32
    %c0_i32_0 = arith.constant 0 : i32
    %c0_i32_1 = arith.constant 0 : i32
    return %arg0, %c0_i32, %c0_i32_0 : i32, i32, i32
  }
}

</mosaic_0001>

<llo_original>
// kernel: tpu_custom_call.1
$region0: #{tpu_custom_call.1}
  #allocation0 [shape = 'u32[]', space=smem, size = 0x4, offset = 0x4, fixed_abs, tag = 'smem constant byte address 0x4 - core index']
  #allocation1 [shape = 'u32[144,128]{1,0:T(1,128)}', space=vmem, size = 0x12000, scoped, tag = 'internal scratch']
  %s0 = inlined_call_operand.hbm [shape: f32[2,16,128], index: 0, kind: input, shape index: {}]
  %s1 = inlined_call_operand.hbm [shape: f32[3,128,128], index: 1, kind: input, shape index: {}]
  %s2 = inlined_call_operand.vmem [shape: f32[1,128], index: 2, kind: input, shape index: {}]
  %s3 = inlined_call_operand.hbm [shape: f32[3,128,128], index: 3, kind: input, shape index: {}]
  %s4 = inlined_call_operand.vmem [shape: f32[1,128], index: 4, kind: input, shape index: {}]
  %s5 = inlined_call_operand.hbm [shape: f32[3,128,128], index: 5, kind: input, shape index: {}]
  %s6 = inlined_call_operand.vmem [shape: f32[1,128], index: 6, kind: input, shape index: {}]
  %s7 = inlined_call_operand.hbm [shape: f32[2,16,128], index: 7, kind: output, shape index: {}]
  %s8 = sld [smem:[#allocation0]]
  $region77: #{tpu_custom_call.1} parent=0
    _
  %s10 = ssub.s32 1, %s8
  %s11 = scalar_select 0, %s10, %s8
  $region1: #{tpu_custom_call.1} parent=0
    #allocation2 [shape = 'u8[16384]{0}', space=vmem, size = 0x4000, scoped, tag = 'input window, operand 0']
    #allocation3 [shape = 's32[2]{0}', space=sflag, size = 0x8, scoped, tag = 'scoped memory for tpu_custom_call.1']
    #allocation4 [shape = 's32[2]{0}', space=sflag, size = 0x8, scoped, tag = 'scoped memory for tpu_custom_call.1']
    #allocation5 [shape = 'u8[196608]{0}', space=vmem, size = 0x30000, scoped, tag = 'input window, operand 1, single buffered']
    #allocation6 [shape = 's32[1]{0}', space=sflag, size = 0x4, scoped, tag = 'scoped memory for tpu_custom_call.1']
    #allocation7 [shape = 'u8[196608]{0}', space=vmem, size = 0x30000, scoped, tag = 'input window, operand 3, single buffered']
    #allocation8 [shape = 'u8[196608]{0}', space=vmem, size = 0x30000, scoped, tag = 'input window, operand 5, single buffered']
    #allocation9 [shape = 's32[1]{0}', space=sflag, size = 0x4, scoped, tag = 'scoped memory for tpu_custom_call.1']
    #allocation10 [shape = 'u8[16384]{0}', space=vmem, size = 0x4000, scoped, tag = 'output window, operand 0']
    %12 = vsyncpa [#allocation3], 0
    %s13 = scalar_lea.sflag [#allocation3], 1
    %14 = vsyncpa %s13, 0
    %15 = vsyncpa [#allocation6], 0
    %16 = vsyncpa [#allocation9], 0
    %17 = vsyncpa [#allocation4], 0
    %s18 = scalar_lea.sflag [#allocation4], 1
    %19 = vsyncpa %s18, 0
    loop: start=0, step=1, limit=4
    $region2: #{tpu_custom_call.1} parent=1 // loop_pre_header
      _
    $region3: #{tpu_custom_call.1} parent=1 // loop_header
      %s21 = sphi 0, %s25
      %p22 = scmp.ge.s32.totalorder %s21, 4
      %s31 = sphi 0, %s33
      %s34 = sphi 0, %s31
      %s35 = sphi 0, %s34
      %s51 = sphi 0, %s35
      %s55 = sphi 0, %s55
      %s57 = sphi 0, %s55
      %s58 = sphi 0, %s57
      %s72 = sphi 0, %s58
      %s76 = sphi 0, %s76
      %s78 = sphi 0, %s76
      %s79 = sphi 0, %s78
      %s93 = sphi 0, %s79
      %s97 = sphi 0, %s97
      %s99 = sphi 0, %s97
      %s100 = sphi 0, %s99
      %s114 = sphi 0, %s100
      %s118 = sphi 0, %s118
      %s120 = sphi 0, %s118
      %s121 = sphi 0, %s120
      %s135 = sphi 0, %s121
      %s139 = sphi 0, %s139
      %s141 = sphi 0, %s139
      %s142 = sphi 0, %s141
      %s156 = sphi 0, %s142
      %s160 = sphi 0, %s160
      %s162 = sphi 0, %s160
      %s163 = sphi 0, %s162
      %s177 = sphi 0, %s163
      %s183 = sphi 0, %s185
      %s186 = sphi 0, %s183
      %s187 = sphi 0, %s186
      %s203 = sphi 0, %s187
    $region4: #{tpu_custom_call.1} parent=1 // loop_header_branch
      %24 = sbr.rel (%p22) target = $region8
    $region5: #{tpu_custom_call.1} parent=1 // loop_body
      %s26 = ssub.s32 %s21, 1
      %s27 = ssub.s32 %s21, 2
      %s28 = sadd.s32 %s21, 1
      %s29 = ssub.s32 %s21, %s28
      %p30 = scmp.eq.s32.totalorder %s29, 0
      %s32 = sadd.s32 %s31, 1
      %s33 = scalar_select %p30, %s31, %s32
      %p36 = pneg %p30
      %p37 = scmp.eq.s32.totalorder %s21, 1
      %p38 = por %p36, %p37
      %p39 = scmp.ne.s32.totalorder %s31, %s34
      %p40 = scmp.eq.s32.totalorder %s21, 0
      %p41 = por %p39, %p40
      %p42 = scmp.ne.s32.totalorder %s31, %s34
      %p43 = scmp.eq.s32.totalorder %s26, 1
      %p44 = por %p42, %p43
      %p45 = scmp.ne.s32.totalorder %s34, %s35
      %p46 = scmp.eq.s32.totalorder %s26, 0
      %p47 = por %p45, %p46
      %p48 = scmp.ne.s32.totalorder %s34, %s35
      %p49 = scmp.eq.s32.totalorder %s27, 1
      %p50 = por %p48, %p49
      %p52 = scmp.ne.s32.totalorder %s35, %s51
      %p53 = scmp.eq.s32.totalorder %s27, 0
      %p54 = por %p52, %p53
      %s56 = sadd.s32 %s55, 1
      %p59 = scmp.eq.s32.totalorder %s21, 1
      %p60 = scmp.ne.s32.totalorder %s55, %s57
      %p61 = scmp.eq.s32.totalorder %s21, 0
      %p62 = por %p60, %p61
      %p63 = scmp.ne.s32.totalorder %s55, %s57
      %p64 = scmp.eq.s32.totalorder %s26, 1
      %p65 = por %p63, %p64
      %p66 = scmp.ne.s32.totalorder %s57, %s58
      %p67 = scmp.eq.s32.totalorder %s26, 0
      %p68 = por %p66, %p67
      %p69 = scmp.ne.s32.totalorder %s57, %s58
      %p70 = scmp.eq.s32.totalorder %s27, 1
      %p71 = por %p69, %p70
      %p73 = scmp.ne.s32.totalorder %s58, %s72
      %p74 = scmp.eq.s32.totalorder %s27, 0
      %p75 = por %p73, %p74
      %s77 = sadd.s32 %s76, 1
      %p80 = scmp.eq.s32.totalorder %s21, 1
      %p81 = scmp.ne.s32.totalorder %s76, %s78
      %p82 = scmp.eq.s32.totalorder %s21, 0
      %p83 = por %p81, %p82
      %p84 = scmp.ne.s32.totalorder %s76, %s78
      %p85 = scmp.eq.s32.totalorder %s26, 1
      %p86 = por %p84, %p85
      %p87 = scmp.ne.s32.totalorder %s78, %s79
      %p88 = scmp.eq.s32.totalorder %s26, 0
      %p89 = por %p87, %p88
      %p90 = scmp.ne.s32.totalorder %s78, %s79
      %p91 = scmp.eq.s32.totalorder %s27, 1
      %p92 = por %p90, %p91
      %p94 = scmp.ne.s32.totalorder %s79, %s93
      %p95 = scmp.eq.s32.totalorder %s27, 0
      %p96 = por %p94, %p95
      %s98 = sadd.s32 %s97, 1
      %p101 = scmp.eq.s32.totalorder %s21, 1
      %p102 = scmp.ne.s32.totalorder %s97, %s99
      %p103 = scmp.eq.s32.totalorder %s21, 0
      %p104 = por %p102, %p103
      %p105 = scmp.ne.s32.totalorder %s97, %s99
      %p106 = scmp.eq.s32.totalorder %s26, 1
      %p107 = por %p105, %p106
      %p108 = scmp.ne.s32.totalorder %s99, %s100
      %p109 = scmp.eq.s32.totalorder %s26, 0
      %p110 = por %p108, %p109
      %p111 = scmp.ne.s32.totalorder %s99, %s100
      %p112 = scmp.eq.s32.totalorder %s27, 1
      %p113 = por %p111, %p112
      %p115 = scmp.ne.s32.totalorder %s100, %s114
      %p116 = scmp.eq.s32.totalorder %s27, 0
      %p117 = por %p115, %p116
      %s119 = sadd.s32 %s118, 1
      %p122 = scmp.eq.s32.totalorder %s21, 1
      %p123 = scmp.ne.s32.totalorder %s118, %s120
      %p124 = scmp.eq.s32.totalorder %s21, 0
      %p125 = por %p123, %p124
      %p126 = scmp.ne.s32.totalorder %s118, %s120
      %p127 = scmp.eq.s32.totalorder %s26, 1
      %p128 = por %p126, %p127
      %p129 = scmp.ne.s32.totalorder %s120, %s121
      %p130 = scmp.eq.s32.totalorder %s26, 0
      %p131 = por %p129, %p130
      %p132 = scmp.ne.s32.totalorder %s120, %s121
      %p133 = scmp.eq.s32.totalorder %s27, 1
      %p134 = por %p132, %p133
      %p136 = scmp.ne.s32.totalorder %s121, %s135
      %p137 = scmp.eq.s32.totalorder %s27, 0
      %p138 = por %p136, %p137
      %s140 = sadd.s32 %s139, 1
      %p143 = scmp.eq.s32.totalorder %s21, 1
      %p144 = scmp.ne.s32.totalorder %s139, %s141
      %p145 = scmp.eq.s32.totalorder %s21, 0
      %p146 = por %p144, %p145
      %p147 = scmp.ne.s32.totalorder %s139, %s141
      %p148 = scmp.eq.s32.totalorder %s26, 1
      %p149 = por %p147, %p148
      %p150 = scmp.ne.s32.totalorder %s141, %s142
      %p151 = scmp.eq.s32.totalorder %s26, 0
      %p152 = por %p150, %p151
      %p153 = scmp.ne.s32.totalorder %s141, %s142
      %p154 = scmp.eq.s32.totalorder %s27, 1
      %p155 = por %p153, %p154
      %p157 = scmp.ne.s32.totalorder %s142, %s156
      %p158 = scmp.eq.s32.totalorder %s27, 0
      %p159 = por %p157, %p158
      %s161 = sadd.s32 %s160, 1
      %p164 = scmp.eq.s32.totalorder %s21, 1
      %p165 = scmp.ne.s32.totalorder %s160, %s162
      %p166 = scmp.eq.s32.totalorder %s21, 0
      %p167 = por %p165, %p166
      %p168 = scmp.ne.s32.totalorder %s160, %s162
      %p169 = scmp.eq.s32.totalorder %s26, 1
      %p170 = por %p168, %p169
      %p171 = scmp.ne.s32.totalorder %s162, %s163
      %p172 = scmp.eq.s32.totalorder %s26, 0
      %p173 = por %p171, %p172
      %p174 = scmp.ne.s32.totalorder %s162, %s163
      %p175 = scmp.eq.s32.totalorder %s27, 1
      %p176 = por %p174, %p175
      %p178 = scmp.ne.s32.totalorder %s163, %s177
      %p179 = scmp.eq.s32.totalorder %s27, 0
      %p180 = por %p178, %p179
      %s181 = ssub.s32 %s21, %s28
      %p182 = scmp.eq.s32.totalorder %s181, 0
      %s184 = sadd.s32 %s183, 1
      %s185 = scalar_select %p182, %s183, %s184
      %p188 = pneg %p182
      %p189 = scmp.eq.s32.totalorder %s21, 1
      %p190 = por %p188, %p189
      %p191 = scmp.ne.s32.totalorder %s183, %s186
      %p192 = scmp.eq.s32.totalorder %s21, 0
      %p193 = por %p191, %p192
      %p194 = scmp.ne.s32.totalorder %s183, %s186
      %p195 = scmp.eq.s32.totalorder %s26, 1
      %p196 = por %p194, %p195
      %p197 = scmp.ne.s32.totalorder %s186, %s187
      %p198 = scmp.eq.s32.totalorder %s26, 0
      %p199 = por %p197, %p198
      %p200 = scmp.ne.s32.totalorder %s186, %s187
      %p201 = scmp.eq.s32.totalorder %s27, 1
      %p202 = por %p200, %p201
      %p204 = scmp.ne.s32.totalorder %s187, %s203
      %p205 = scmp.eq.s32.totalorder %s27, 0
      %p206 = por %p204, %p205
      %p207 = scmp.le.s32.totalorder 1, %s21
      %p208 = scmp.lt.s32.totalorder %s21, 3
      %p209 = pnand %p207, %p208
      %p210 = pneg %p209
      // Predicated region
      $region9: #{tpu_custom_call.1} parent=5 // pred_check
        _
      $region10: #{tpu_custom_call.1} parent=5 // pred_check_branch
        %212 = sbr.rel (%p209) target = $region12
      $region11: #{tpu_custom_call.1} parent=5 // pred_region
        %s213 = ssub.s32 %s21, 1
        // Predicated region
        $region13: #{tpu_custom_call.1} parent=11 // pred_check
          %p214 = pneg %p68
        $region14: #{tpu_custom_call.1} parent=11 // pred_check_branch
          %216 = sbr.rel (%p214) target = $region16
        $region15: #{tpu_custom_call.1} parent=11 // pred_region
          %s218 = ssub.s32 6144, 6144
          %219 = vsyncadd [#allocation6], %s218
          %s220 = sshll.u32 [#allocation5], 4
          %s221 = int_to_ptr.vmem [resolvable:$true] %s220
          %226 = dma.hbm_to_vmem [thread:$0]  %s1, 6144, %s221, [#allocation6], 128, 128, 8
        $region16: #{tpu_custom_call.1} parent=11 // pred_fallthru
          _
        // Predicated region
        $region17: #{tpu_custom_call.1} parent=11 // pred_check
          %p227 = pneg %p89
        $region18: #{tpu_custom_call.1} parent=11 // pred_check_branch
          %229 = sbr.rel (%p227) target = $region20
        $region19: #{tpu_custom_call.1} parent=11 // pred_region
          _
        $region20: #{tpu_custom_call.1} parent=11 // pred_fallthru
          _
        // Predicated region
        $region21: #{tpu_custom_call.1} parent=11 // pred_check
          %p230 = pneg %p110
        $region22: #{tpu_custom_call.1} parent=11 // pred_check_branch
          %232 = sbr.rel (%p230) target = $region24
        $region23: #{tpu_custom_call.1} parent=11 // pred_region
          %s234 = ssub.s32 6144, 6144
          %235 = vsyncadd [#allocation6], %s234
          %s236 = sshll.u32 [#allocation7], 4
          %s237 = int_to_ptr.vmem [resolvable:$true] %s236
          %242 = dma.hbm_to_vmem [thread:$0]  %s3, 6144, %s237, [#allocation6], 128, 128, 8
        $region24: #{tpu_custom_call.1} parent=11 // pred_fallthru
          _
        // Predicated region
        $region25: #{tpu_custom_call.1} parent=11 // pred_check
          %p243 = pneg %p131
        $region26: #{tpu_custom_call.1} parent=11 // pred_check_branch
          %245 = sbr.rel (%p243) target = $region28
        $region27: #{tpu_custom_call.1} parent=11 // pred_region
          _
        $region28: #{tpu_custom_call.1} parent=11 // pred_fallthru
          _
        // Predicated region
        $region29: #{tpu_custom_call.1} parent=11 // pred_check
          %p246 = pneg %p152
        $region30: #{tpu_custom_call.1} parent=11 // pred_check_branch
          %248 = sbr.rel (%p246) target = $region32
        $region31: #{tpu_custom_call.1} parent=11 // pred_region
          %s250 = ssub.s32 6144, 6144
          %251 = vsyncadd [#allocation9], %s250
          %s252 = sshll.u32 [#allocation8], 4
          %s253 = int_to_ptr.vmem [resolvable:$true] %s252
          %258 = dma.hbm_to_vmem [thread:$0]  %s5, 6144, %s253, [#allocation9], 128, 128, 8
        $region32: #{tpu_custom_call.1} parent=11 // pred_fallthru
          _
        // Predicated region
        $region33: #{tpu_custom_call.1} parent=11 // pred_check
          %p259 = pneg %p173
        $region34: #{tpu_custom_call.1} parent=11 // pred_check_branch
          %261 = sbr.rel (%p259) target = $region36
        $region35: #{tpu_custom_call.1} parent=11 // pred_region
          _
        $region36: #{tpu_custom_call.1} parent=11 // pred_fallthru
          _
      $region12: #{tpu_custom_call.1} parent=5 // pred_fallthru
        _
      %p262 = scmp.lt.s32.totalorder %s21, 2
      // Predicated region
      $region37: #{tpu_custom_call.1} parent=5 // pred_check
        %p263 = pneg %p262
      $region38: #{tpu_custom_call.1} parent=5 // pred_check_branch
        %265 = sbr.rel (%p263) target = $region40
      $region39: #{tpu_custom_call.1} parent=5 // pred_region
        // Predicated region
        $region41: #{tpu_custom_call.1} parent=39 // pred_check
          %p266 = pneg %p41
        $region42: #{tpu_custom_call.1} parent=39 // pred_check_branch
          %268 = sbr.rel (%p266) target = $region44
        $region43: #{tpu_custom_call.1} parent=39 // pred_region
          %s269 = sand.u32 %s31, 1
          %s270 = scalar_lea.sflag [#allocation3], %s269
          %s271 = sand.u32 %s31, 1
          %s272 = smul.addr %s271, 16
          %s273 = scalar_lea.vmem [#allocation2], %s272
          %s275 = ssub.s32 256, 256
          %276 = vsyncadd %s270, %s275
          %s277 = smul.addr %s21, 2
          %s278 = smul.addr %s277, 128
          %s279 = scalar_lea.hbm %s0, %s278
          %s280 = sshll.u32 %s273, 4
          %s281 = int_to_ptr.vmem [resolvable:$true] %s280
          %286 = dma.hbm_to_vmem [thread:$0]  %s279, 256, %s281, %s270, 128, 128, 8
        $region44: #{tpu_custom_call.1} parent=39 // pred_fallthru
          _
      $region40: #{tpu_custom_call.1} parent=5 // pred_fallthru
        _
      %p287 = scmp.le.s32.totalorder 1, %s21
      %p288 = scmp.lt.s32.totalorder %s21, 3
      %p289 = pnand %p287, %p288
      %p290 = pneg %p289
      // Predicated region
      $region45: #{tpu_custom_call.1} parent=5 // pred_check
        _
      $region46: #{tpu_custom_call.1} parent=5 // pred_check_branch
        %292 = sbr.rel (%p289) target = $region48
      $region47: #{tpu_custom_call.1} parent=5 // pred_region
        %s293 = ssub.s32 %s21, 1
        %s294 = sand.u32 %s34, 1
        %s295 = scalar_lea.sflag [#allocation3], %s294
        %s296 = sand.u32 %s34, 1
        %s297 = smul.addr %s296, 16
        %s298 = scalar_lea.vmem [#allocation2], %s297
        // Predicated region
        $region49: #{tpu_custom_call.1} parent=47 // pred_check
          %p299 = pneg %p47
        $region50: #{tpu_custom_call.1} parent=47 // pred_check_branch
          %301 = sbr.rel (%p299) target = $region52
        $region51: #{tpu_custom_call.1} parent=47 // pred_region
          %302 = dma.done %s295, 256
        $region52: #{tpu_custom_call.1} parent=47 // pred_fallthru
          _
        // Predicated region
        $region53: #{tpu_custom_call.1} parent=47 // pred_check
          %p303 = pneg %p68
        $region54: #{tpu_custom_call.1} parent=47 // pred_check_branch
          %305 = sbr.rel (%p303) target = $region56
        $region55: #{tpu_custom_call.1} parent=47 // pred_region
          %306 = dma.done [#allocation6], 6144
        $region56: #{tpu_custom_call.1} parent=47 // pred_fallthru
          _
        // Predicated region
        $region57: #{tpu_custom_call.1} parent=47 // pred_check
          %p307 = pneg %p110
        $region58: #{tpu_custom_call.1} parent=47 // pred_check_branch
          %309 = sbr.rel (%p307) target = $region60
        $region59: #{tpu_custom_call.1} parent=47 // pred_region
          %310 = dma.done [#allocation6], 6144
        $region60: #{tpu_custom_call.1} parent=47 // pred_fallthru
          _
        // Predicated region
        $region61: #{tpu_custom_call.1} parent=47 // pred_check
          %p311 = pneg %p152
        $region62: #{tpu_custom_call.1} parent=47 // pred_check_branch
          %313 = sbr.rel (%p311) target = $region64
        $region63: #{tpu_custom_call.1} parent=47 // pred_region
          %314 = dma.done [#allocation9], 6144
        $region64: #{tpu_custom_call.1} parent=47 // pred_fallthru
          _
        %s315 = sand.u32 %s34, 1
        %s316 = scalar_lea.sflag [#allocation3], %s315
        %s317 = sand.u32 %s34, 1
        %s318 = smul.addr %s317, 16
        %s319 = scalar_lea.vmem [#allocation2], %s318
        %p320 = pneg %p47
        %p321 = pneg %p44
        %p322 = pneg %p68
        %p323 = pneg %p65
        %p324 = pneg %p89
        %p325 = pneg %p86
        %p326 = pneg %p110
        %p327 = pneg %p107
        %p328 = pneg %p131
        %p329 = pneg %p128
        %p330 = pneg %p152
        %p331 = pneg %p149
        %p332 = pneg %p173
        %p333 = pneg %p170
        %p334 = pneg %p199
        %p335 = pneg %p196
        %s336 = sand.u32 %s186, 1
        %s337 = scalar_lea.sflag [#allocation4], %s336
        %s338 = sand.u32 %s186, 1
        %s339 = smul.addr %s338, 16
        %s340 = scalar_lea.vmem [#allocation10], %s339
        %v341 = vld [vmem:[%s298] sm:$0xff]
        %v342 = vld [vmem:[%s298 + $0x8] sm:$0xff]
        %v343 = vlaneseq
        %v344 = vshrl.u32 %v343, 7
        %v345 = vadd.s32 %v344, 8
        %v346 = vlaneseq
        %v347 = vand.u32 %v346, 127
        %v348 = vsub.s32 %v344, 1
        %v349 = vsub.s32 %v345, 1
        %vm350 = vcmp.eq.s32.totalorder %v347, %v348
        %vm351 = vcmp.eq.s32.totalorder %v347, %v349
        %v352 = vsel %vm350, 1, 0
        %v353 = vsel %vm351, 1, 0
        %v354 = vcvt.s32.f32 %v352
        %v355 = vcvt.s32.f32 %v353
        %v356 = vadd.s32 %v344, 1
        %v357 = vadd.s32 %v345, 1
        %vm358 = vcmp.eq.s32.totalorder %v347, %v356
        %vm359 = vcmp.eq.s32.totalorder %v347, %v357
        %v360 = vsel %vm358, 1, 0
        %v361 = vsel %vm359, 1, 0
        %v362 = vcvt.s32.f32 %v360
        %v363 = vcvt.s32.f32 %v361
        %s364 = scalar_lea.vmem [#allocation5], 128
        %v365 = vld [vmem:[%s364] sm:$0xff]
        %v366 = vld [vmem:[%s364 + $0x8] sm:$0xff]
        %v367 = vld [vmem:[%s364 + $0x10] sm:$0xff]
        %v368 = vld [vmem:[%s364 + $0x18] sm:$0xff]
        %v369 = vld [vmem:[%s364 + $0x20] sm:$0xff]
        %v370 = vld [vmem:[%s364 + $0x28] sm:$0xff]
        %v371 = vld [vmem:[%s364 + $0x30] sm:$0xff]
        %v372 = vld [vmem:[%s364 + $0x38] sm:$0xff]
        %v373 = vld [vmem:[%s364 + $0x40] sm:$0xff]
        %v374 = vld [vmem:[%s364 + $0x48] sm:$0xff]
        %v375 = vld [vmem:[%s364 + $0x50] sm:$0xff]
        %v376 = vld [vmem:[%s364 + $0x58] sm:$0xff]
        %v377 = vld [vmem:[%s364 + $0x60] sm:$0xff]
        %v378 = vld [vmem:[%s364 + $0x68] sm:$0xff]
        %v379 = vld [vmem:[%s364 + $0x70] sm:$0xff]
        %v380 = vld [vmem:[%s364 + $0x78] sm:$0xff]
        %vm381 = vcmask 130048
        %v383 = vsel %vm381, %v354, 0
        %v386 = vsel %vm381, %v355, 0
        %388 = vmatprep.subr.mxu0 0.0
        %389 = vmatpush1.msra.mxu0 %v341
        %390 = vmatprep.subr.mxu0 0.0
        %391 = vmatpush1.msra.mxu0 %v342
        %392 = vmatprep.subr.mxu0 0.0
        %393 = vmatpush1.msra.mxu0 0.0
        %394 = vmatprep.subr.mxu0 0.0
        %395 = vmatpush1.msra.mxu0 0.0
        %396 = vmatprep.subr.mxu0 0.0
        %397 = vmatpush1.msra.mxu0 0.0
        %398 = vmatprep.subr.mxu0 0.0
        %399 = vmatpush1.msra.mxu0 0.0
        %400 = vmatprep.subr.mxu0 0.0
        %401 = vmatpush1.msra.mxu0 0.0
        %402 = vmatprep.subr.mxu0 0.0
        %403 = vmatpush1.msra.mxu0 0.0
        %404 = vmatprep.subr.mxu0 0.0
        %405 = vmatpush1.msra.mxu0 0.0
        %406 = vmatprep.subr.mxu0 0.0
        %407 = vmatpush1.msra.mxu0 0.0
        %408 = vmatprep.subr.mxu0 0.0
        %409 = vmatpush1.msra.mxu0 0.0
        %410 = vmatprep.subr.mxu0 0.0
        %411 = vmatpush1.msra.mxu0 0.0
        %412 = vmatprep.subr.mxu0 0.0
        %413 = vmatpush1.msra.mxu0 0.0
        %414 = vmatprep.subr.mxu0 0.0
        %415 = vmatpush1.msra.mxu0 0.0
        %416 = vmatprep.subr.mxu0 0.0
        %417 = vmatpush1.msra.mxu0 0.0
        %418 = vmatprep.subr.mxu0 0.0
        %419 = vmatpush1.msra.mxu0 0.0
        %420 = vmatprep.subr.mxu0 0.0
        %421 = vmatpush1.msra.mxu0 0.0
        %422 = vmatprep.subr.mxu0 0.0
        %423 = vmatpush1.msra.mxu0 0.0
        %424 = vmatprep.subr.mxu0 0.0
        %425 = vmatpush1.msra.mxu0 0.0
        %426 = vmatprep.subr.mxu0 0.0
        %427 = vmatpush1.msra.mxu0 0.0
        %428 = vmatprep.subr.mxu0 0.0
        %429 = vmatpush1.msra.mxu0 0.0
        %430 = vmatprep.subr.mxu0 0.0
        %431 = vmatpush1.msra.mxu0 0.0
        %432 = vmatprep.subr.mxu0 0.0
        %433 = vmatpush1.msra.mxu0 0.0
        %434 = vmatprep.subr.mxu0 0.0
        %435 = vmatpush1.msra.mxu0 0.0
        %436 = vmatprep.subr.mxu0 0.0
        %437 = vmatpush1.msra.mxu0 0.0
        %438 = vmatprep.subr.mxu0 0.0
        %439 = vmatpush1.msra.mxu0 0.0
        %440 = vmatprep.subr.mxu0 0.0
        %441 = vmatpush1.msra.mxu0 0.0
        %442 = vmatprep.subr.mxu0 0.0
        %443 = vmatpush1.msra.mxu0 0.0
        %444 = vmatprep.subr.mxu0 0.0
        %445 = vmatpush1.msra.mxu0 0.0
        %446 = vmatprep.subr.mxu0 0.0
        %447 = vmatpush1.msra.mxu0 0.0
        %448 = vmatprep.subr.mxu0 0.0
        %449 = vmatpush1.msra.mxu0 0.0
        %450 = vmatprep.subr.mxu0 0.0
        %451 = vmatpush1.msra.mxu0 0.0
        %452 = vmatprep.mubr.f32.mxu0 0.0
        %453 = vmatmul.mubr.f32.gmra.mrb[0].mxu0 %v383
        %v454 = vpop.f32.mrb[0].mxu0
        %v455 = vadd.f32 0.0, %v454
        %v456 = vpop.f32.mrb[0].mxu0
        %457 = vmatprep.mubr.f32.mxu0 0.0
        %458 = vmatmul.mubr.f32.gmra.mrb[0].mxu0 %v386
        %v459 = vpop.f32.mrb[0].mxu0
        %v460 = vadd.f32 0.0, %v459
        %v461 = vpop.f32.mrb[0].mxu0
        %462 = vdwg.mxu0
        %v463 = vld [vmem:[#allocation5] sm:$0xff]
        %v464 = vld [vmem:[#allocation5 + $0x8] sm:$0xff]
        %v465 = vld [vmem:[#allocation5 + $0x10] sm:$0xff]
        %v466 = vld [vmem:[#allocation5 + $0x18] sm:$0xff]
        %v467 = vld [vmem:[#allocation5 + $0x20] sm:$0xff]
        %v468 = vld [vmem:[#allocation5 + $0x28] sm:$0xff]
        %v469 = vld [vmem:[#allocation5 + $0x30] sm:$0xff]
        %v470 = vld [vmem:[#allocation5 + $0x38] sm:$0xff]
        %v471 = vld [vmem:[#allocation5 + $0x40] sm:$0xff]
        %v472 = vld [vmem:[#allocation5 + $0x48] sm:$0xff]
        %v473 = vld [vmem:[#allocation5 + $0x50] sm:$0xff]
        %v474 = vld [vmem:[#allocation5 + $0x58] sm:$0xff]
        %v475 = vld [vmem:[#allocation5 + $0x60] sm:$0xff]
        %v476 = vld [vmem:[#allocation5 + $0x68] sm:$0xff]
        %v477 = vld [vmem:[#allocation5 + $0x70] sm:$0xff]
        %v478 = vld [vmem:[#allocation5 + $0x78] sm:$0xff]
        %479 = vmatprep.subr.mxu0 0.0
        %480 = vmatpush1.msra.mxu0 %v463
        %481 = vmatprep.subr.mxu0 0.0
        %482 = vmatpush1.msra.mxu0 %v464
        %483 = vmatprep.subr.mxu0 0.0
        %484 = vmatpush1.msra.mxu0 %v465
        %485 = vmatprep.subr.mxu0 0.0
        %486 = vmatpush1.msra.mxu0 %v466
        %487 = vmatprep.subr.mxu0 0.0
        %488 = vmatpush1.msra.mxu0 %v467
        %489 = vmatprep.subr.mxu0 0.0
        %490 = vmatpush1.msra.mxu0 %v468
        %491 = vmatprep.subr.mxu0 0.0
        %492 = vmatpush1.msra.mxu0 %v469
        %493 = vmatprep.subr.mxu0 0.0
        %494 = vmatpush1.msra.mxu0 %v470
        %495 = vmatprep.subr.mxu0 0.0
        %496 = vmatpush1.msra.mxu0 %v471
        %497 = vmatprep.subr.mxu0 0.0
        %498 = vmatpush1.msra.mxu0 %v472
        %499 = vmatprep.subr.mxu0 0.0
        %500 = vmatpush1.msra.mxu0 %v473
        %501 = vmatprep.subr.mxu0 0.0
        %502 = vmatpush1.msra.mxu0 %v474
        %503 = vmatprep.subr.mxu0 0.0
        %504 = vmatpush1.msra.mxu0 %v475
        %505 = vmatprep.subr.mxu0 0.0
        %506 = vmatpush1.msra.mxu0 %v476
        %507 = vmatprep.subr.mxu0 0.0
        %508 = vmatpush1.msra.mxu0 %v477
        %509 = vmatprep.subr.mxu0 0.0
        %510 = vmatpush1.msra.mxu0 %v478
        %511 = vmatprep.subr.mxu0 0.0
        %512 = vmatpush1.msra.mxu0 0.0
        %513 = vmatprep.subr.mxu0 0.0
        %514 = vmatpush1.msra.mxu0 0.0
        %515 = vmatprep.subr.mxu0 0.0
        %516 = vmatpush1.msra.mxu0 0.0
        %517 = vmatprep.subr.mxu0 0.0
        %518 = vmatpush1.msra.mxu0 0.0
        %519 = vmatprep.subr.mxu0 0.0
        %520 = vmatpush1.msra.mxu0 0.0
        %521 = vmatprep.subr.mxu0 0.0
        %522 = vmatpush1.msra.mxu0 0.0
        %523 = vmatprep.subr.mxu0 0.0
        %524 = vmatpush1.msra.mxu0 0.0
        %525 = vmatprep.subr.mxu0 0.0
        %526 = vmatpush1.msra.mxu0 0.0
        %527 = vmatprep.subr.mxu0 0.0
        %528 = vmatpush1.msra.mxu0 0.0
        %529 = vmatprep.subr.mxu0 0.0
        %530 = vmatpush1.msra.mxu0 0.0
        %531 = vmatprep.subr.mxu0 0.0
        %532 = vmatpush1.msra.mxu0 0.0
        %533 = vmatprep.subr.mxu0 0.0
        %534 = vmatpush1.msra.mxu0 0.0
        %535 = vmatprep.subr.mxu0 0.0
        %536 = vmatpush1.msra.mxu0 0.0
        %537 = vmatprep.subr.mxu0 0.0
        %538 = vmatpush1.msra.mxu0 0.0
        %539 = vmatprep.subr.mxu0 0.0
        %540 = vmatpush1.msra.mxu0 0.0
        %541 = vmatprep.subr.mxu0 0.0
        %542 = vmatpush1.msra.mxu0 0.0
        %543 = vmatprep.mubr.f32.mxu0 0.0
        %544 = vmatmul.mubr.f32.gmra.mrb[0].mxu0 %v455
        %v545 = vpop.f32.mrb[0].mxu0
        %v546 = vadd.f32 0.0, %v545
        %v547 = vpop.f32.mrb[0].mxu0
        %548 = vmatprep.mubr.f32.mxu0 0.0
        %549 = vmatmul.mubr.f32.gmra.mrb[0].mxu0 %v460
        %v550 = vpop.f32.mrb[0].mxu0
        %v551 = vadd.f32 0.0, %v550
        %v552 = vpop.f32.mrb[0].mxu0
        %553 = vdwg.mxu0
        %554 = vmatprep.subr.mxu0 0.0
        %555 = vmatpush1.msra.mxu0 %v365
        %556 = vmatprep.subr.mxu0 0.0
        %557 = vmatpush1.msra.mxu0 %v366
        %558 = vmatprep.subr.mxu0 0.0
        %559 = vmatpush1.msra.mxu0 %v367
        %560 = vmatprep.subr.mxu0 0.0
        %561 = vmatpush1.msra.mxu0 %v368
        %562 = vmatprep.subr.mxu0 0.0
        %563 = vmatpush1.msra.mxu0 %v369
        %564 = vmatprep.subr.mxu0 0.0
        %565 = vmatpush1.msra.mxu0 %v370
        %566 = vmatprep.subr.mxu0 0.0
        %567 = vmatpush1.msra.mxu0 %v371
        %568 = vmatprep.subr.mxu0 0.0
        %569 = vmatpush1.msra.mxu0 %v372
        %570 = vmatprep.subr.mxu0 0.0
        %571 = vmatpush1.msra.mxu0 %v373
        %572 = vmatprep.subr.mxu0 0.0
        %573 = vmatpush1.msra.mxu0 %v374
        %574 = vmatprep.subr.mxu0 0.0
        %575 = vmatpush1.msra.mxu0 %v375
        %576 = vmatprep.subr.mxu0 0.0
        %577 = vmatpush1.msra.mxu0 %v376
        %578 = vmatprep.subr.mxu0 0.0
        %579 = vmatpush1.msra.mxu0 %v377
        %580 = vmatprep.subr.mxu0 0.0
        %581 = vmatpush1.msra.mxu0 %v378
        %582 = vmatprep.subr.mxu0 0.0
        %583 = vmatpush1.msra.mxu0 %v379
        %584 = vmatprep.subr.mxu0 0.0
        %585 = vmatpush1.msra.mxu0 %v380
        %586 = vmatprep.subr.mxu0 0.0
        %587 = vmatpush1.msra.mxu0 0.0
        %588 = vmatprep.subr.mxu0 0.0
        %589 = vmatpush1.msra.mxu0 0.0
        %590 = vmatprep.subr.mxu0 0.0
        %591 = vmatpush1.msra.mxu0 0.0
        %592 = vmatprep.subr.mxu0 0.0
        %593 = vmatpush1.msra.mxu0 0.0
        %594 = vmatprep.subr.mxu0 0.0
        %595 = vmatpush1.msra.mxu0 0.0
        %596 = vmatprep.subr.mxu0 0.0
        %597 = vmatpush1.msra.mxu0 0.0
        %598 = vmatprep.subr.mxu0 0.0
        %599 = vmatpush1.msra.mxu0 0.0
        %600 = vmatprep.subr.mxu0 0.0
        %601 = vmatpush1.msra.mxu0 0.0
        %602 = vmatprep.subr.mxu0 0.0
        %603 = vmatpush1.msra.mxu0 0.0
        %604 = vmatprep.subr.mxu0 0.0
        %605 = vmatpush1.msra.mxu0 0.0
        %606 = vmatprep.subr.mxu0 0.0
        %607 = vmatpush1.msra.mxu0 0.0
        %608 = vmatprep.subr.mxu0 0.0
        %609 = vmatpush1.msra.mxu0 0.0
        %610 = vmatprep.subr.mxu0 0.0
        %611 = vmatpush1.msra.mxu0 0.0
        %612 = vmatprep.subr.mxu0 0.0
        %613 = vmatpush1.msra.mxu0 0.0
        %614 = vmatprep.subr.mxu0 0.0
        %615 = vmatpush1.msra.mxu0 0.0
        %616 = vmatprep.subr.mxu0 0.0
        %617 = vmatpush1.msra.mxu0 0.0
        %618 = vmatprep.mubr.f32.mxu0 0.0
        %619 = vmatmul.mubr.f32.gmra.mrb[0].mxu0 %v341
        %v620 = vpop.f32.mrb[0].mxu0
        %v621 = vadd.f32 %v546, %v620
        %v622 = vpop.f32.mrb[0].mxu0
        %623 = vmatprep.mubr.f32.mxu0 0.0
        %624 = vmatmul.mubr.f32.gmra.mrb[0].mxu0 %v342
        %v625 = vpop.f32.mrb[0].mxu0
        %v626 = vadd.f32 %v551, %v625
        %v627 = vpop.f32.mrb[0].mxu0
        %628 = vdwg.mxu0
        %v630 = vsel %vm381, %v362, 0
        %v633 = vsel %vm381, %v363, 0
        %635 = vmatprep.subr.mxu0 0.0
        %636 = vmatpush1.msra.mxu0 %v341
        %637 = vmatprep.subr.mxu0 0.0
        %638 = vmatpush1.msra.mxu0 %v342
        %639 = vmatprep.subr.mxu0 0.0
        %640 = vmatpush1.msra.mxu0 0.0
        %641 = vmatprep.subr.mxu0 0.0
        %642 = vmatpush1.msra.mxu0 0.0
        %643 = vmatprep.subr.mxu0 0.0
        %644 = vmatpush1.msra.mxu0 0.0
        %645 = vmatprep.subr.mxu0 0.0
        %646 = vmatpush1.msra.mxu0 0.0
        %647 = vmatprep.subr.mxu0 0.0
        %648 = vmatpush1.msra.mxu0 0.0
        %649 = vmatprep.subr.mxu0 0.0
        %650 = vmatpush1.msra.mxu0 0.0
        %651 = vmatprep.subr.mxu0 0.0
        %652 = vmatpush1.msra.mxu0 0.0
        %653 = vmatprep.subr.mxu0 0.0
        %654 = vmatpush1.msra.mxu0 0.0
        %655 = vmatprep.subr.mxu0 0.0
        %656 = vmatpush1.msra.mxu0 0.0
        %657 = vmatprep.subr.mxu0 0.0
        %658 = vmatpush1.msra.mxu0 0.0
        %659 = vmatprep.subr.mxu0 0.0
        %660 = vmatpush1.msra.mxu0 0.0
        %661 = vmatprep.subr.mxu0 0.0
        %662 = vmatpush1.msra.mxu0 0.0
        %663 = vmatprep.subr.mxu0 0.0
        %664 = vmatpush1.msra.mxu0 0.0
        %665 = vmatprep.subr.mxu0 0.0
        %666 = vmatpush1.msra.mxu0 0.0
        %667 = vmatprep.subr.mxu0 0.0
        %668 = vmatpush1.msra.mxu0 0.0
        %669 = vmatprep.subr.mxu0 0.0
        %670 = vmatpush1.msra.mxu0 0.0
        %671 = vmatprep.subr.mxu0 0.0
        %672 = vmatpush1.msra.mxu0 0.0
        %673 = vmatprep.subr.mxu0 0.0
        %674 = vmatpush1.msra.mxu0 0.0
        %675 = vmatprep.subr.mxu0 0.0
        %676 = vmatpush1.msra.mxu0 0.0
        %677 = vmatprep.subr.mxu0 0.0
        %678 = vmatpush1.msra.mxu0 0.0
        %679 = vmatprep.subr.mxu0 0.0
        %680 = vmatpush1.msra.mxu0 0.0
        %681 = vmatprep.subr.mxu0 0.0
        %682 = vmatpush1.msra.mxu0 0.0
        %683 = vmatprep.subr.mxu0 0.0
        %684 = vmatpush1.msra.mxu0 0.0
        %685 = vmatprep.subr.mxu0 0.0
        %686 = vmatpush1.msra.mxu0 0.0
        %687 = vmatprep.subr.mxu0 0.0
        %688 = vmatpush1.msra.mxu0 0.0
        %689 = vmatprep.subr.mxu0 0.0
        %690 = vmatpush1.msra.mxu0 0.0
        %691 = vmatprep.subr.mxu0 0.0
        %692 = vmatpush1.msra.mxu0 0.0
        %693 = vmatprep.subr.mxu0 0.0
        %694 = vmatpush1.msra.mxu0 0.0
        %695 = vmatprep.subr.mxu0 0.0
        %696 = vmatpush1.msra.mxu0 0.0
        %697 = vmatprep.subr.mxu0 0.0
        %698 = vmatpush1.msra.mxu0 0.0
        %699 = vmatprep.mubr.f32.mxu0 0.0
        %700 = vmatmul.mubr.f32.gmra.mrb[0].mxu0 %v630
        %v701 = vpop.f32.mrb[0].mxu0
        %v702 = vadd.f32 0.0, %v701
        %v703 = vpop.f32.mrb[0].mxu0
        %704 = vmatprep.mubr.f32.mxu0 0.0
        %705 = vmatmul.mubr.f32.gmra.mrb[0].mxu0 %v633
        %v706 = vpop.f32.mrb[0].mxu0
        %v707 = vadd.f32 0.0, %v706
        %v708 = vpop.f32.mrb[0].mxu0
        %709 = vdwg.mxu0
        %s710 = scalar_lea.vmem [#allocation5], 256
        %v711 = vld [vmem:[%s710] sm:$0xff]
        %v712 = vld [vmem:[%s710 + $0x8] sm:$0xff]
        %v713 = vld [vmem:[%s710 + $0x10] sm:$0xff]
        %v714 = vld [vmem:[%s710 + $0x18] sm:$0xff]
        %v715 = vld [vmem:[%s710 + $0x20] sm:$0xff]
        %v716 = vld [vmem:[%s710 + $0x28] sm:$0xff]
        %v717 = vld [vmem:[%s710 + $0x30] sm:$0xff]
        %v718 = vld [vmem:[%s710 + $0x38] sm:$0xff]
        %v719 = vld [vmem:[%s710 + $0x40] sm:$0xff]
        %v720 = vld [vmem:[%s710 + $0x48] sm:$0xff]
        %v721 = vld [vmem:[%s710 + $0x50] sm:$0xff]
        %v722 = vld [vmem:[%s710 + $0x58] sm:$0xff]
        %v723 = vld [vmem:[%s710 + $0x60] sm:$0xff]
        %v724 = vld [vmem:[%s710 + $0x68] sm:$0xff]
        %v725 = vld [vmem:[%s710 + $0x70] sm:$0xff]
        %v726 = vld [vmem:[%s710 + $0x78] sm:$0xff]
        %727 = vmatprep.subr.mxu0 0.0
        %728 = vmatpush1.msra.mxu0 %v711
        %729 = vmatprep.subr.mxu0 0.0
        %730 = vmatpush1.msra.mxu0 %v712
        %731 = vmatprep.subr.mxu0 0.0
        %732 = vmatpush1.msra.mxu0 %v713
        %733 = vmatprep.subr.mxu0 0.0
        %734 = vmatpush1.msra.mxu0 %v714
        %735 = vmatprep.subr.mxu0 0.0
        %736 = vmatpush1.msra.mxu0 %v715
        %737 = vmatprep.subr.mxu0 0.0
        %738 = vmatpush1.msra.mxu0 %v716
        %739 = vmatprep.subr.mxu0 0.0
        %740 = vmatpush1.msra.mxu0 %v717
        %741 = vmatprep.subr.mxu0 0.0
        %742 = vmatpush1.msra.mxu0 %v718
        %743 = vmatprep.subr.mxu0 0.0
        %744 = vmatpush1.msra.mxu0 %v719
        %745 = vmatprep.subr.mxu0 0.0
        %746 = vmatpush1.msra.mxu0 %v720
        %747 = vmatprep.subr.mxu0 0.0
        %748 = vmatpush1.msra.mxu0 %v721
        %749 = vmatprep.subr.mxu0 0.0
        %750 = vmatpush1.msra.mxu0 %v722
        %751 = vmatprep.subr.mxu0 0.0
        %752 = vmatpush1.msra.mxu0 %v723
        %753 = vmatprep.subr.mxu0 0.0
        %754 = vmatpush1.msra.mxu0 %v724
        %755 = vmatprep.subr.mxu0 0.0
        %756 = vmatpush1.msra.mxu0 %v725
        %757 = vmatprep.subr.mxu0 0.0
        %758 = vmatpush1.msra.mxu0 %v726
        %759 = vmatprep.subr.mxu0 0.0
        %760 = vmatpush1.msra.mxu0 0.0
        %761 = vmatprep.subr.mxu0 0.0
        %762 = vmatpush1.msra.mxu0 0.0
        %763 = vmatprep.subr.mxu0 0.0
        %764 = vmatpush1.msra.mxu0 0.0
        %765 = vmatprep.subr.mxu0 0.0
        %766 = vmatpush1.msra.mxu0 0.0
        %767 = vmatprep.subr.mxu0 0.0
        %768 = vmatpush1.msra.mxu0 0.0
        %769 = vmatprep.subr.mxu0 0.0
        %770 = vmatpush1.msra.mxu0 0.0
        %771 = vmatprep.subr.mxu0 0.0
        %772 = vmatpush1.msra.mxu0 0.0
        %773 = vmatprep.subr.mxu0 0.0
        %774 = vmatpush1.msra.mxu0 0.0
        %775 = vmatprep.subr.mxu0 0.0
        %776 = vmatpush1.msra.mxu0 0.0
        %777 = vmatprep.subr.mxu0 0.0
        %778 = vmatpush1.msra.mxu0 0.0
        %779 = vmatprep.subr.mxu0 0.0
        %780 = vmatpush1.msra.mxu0 0.0
        %781 = vmatprep.subr.mxu0 0.0
        %782 = vmatpush1.msra.mxu0 0.0
        %783 = vmatprep.subr.mxu0 0.0
        %784 = vmatpush1.msra.mxu0 0.0
        %785 = vmatprep.subr.mxu0 0.0
        %786 = vmatpush1.msra.mxu0 0.0
        %787 = vmatprep.subr.mxu0 0.0
        %788 = vmatpush1.msra.mxu0 0.0
        %789 = vmatprep.subr.mxu0 0.0
        %790 = vmatpush1.msra.mxu0 0.0
        %791 = vmatprep.mubr.f32.mxu0 0.0
        %792 = vmatmul.mubr.f32.gmra.mrb[0].mxu0 %v702
        %v793 = vpop.f32.mrb[0].mxu0
        %v794 = vadd.f32 0.0, %v793
        %v795 = vpop.f32.mrb[0].mxu0
        %796 = vmatprep.mubr.f32.mxu0 0.0
        %797 = vmatmul.mubr.f32.gmra.mrb[0].mxu0 %v707
        %v798 = vpop.f32.mrb[0].mxu0
        %v799 = vadd.f32 0.0, %v798
        %v800 = vpop.f32.mrb[0].mxu0
        %801 = vdwg.mxu0
        %v802 = vadd.f32 %v621, %v794
        %v803 = vadd.f32 %v626, %v799
        %v804 = vld [vmem:[%s2] sm:$0x1]
        %v806 = vlaneseq
        %v807 = vshrl.u32 %v806, 7
        %v808 = vsub.s32 0, %v807
        %v809 = vrot.slane %v804, %v808
        %v811 = vadd.f32 %v802, %v809
        %v812 = vadd.f32 %v803, %v809
        %vm813 = vcmp.gt.f32.partialorder %v811, 0.0
        %vm814 = vcmp.gt.f32.partialorder %v812, 0.0
        %v815 = vmul.f32 %v811, 0.1
        %v816 = vmul.f32 %v812, 0.1
        %v817 = vsel %vm813, %v811, %v815
        %v818 = vsel %vm814, %v812, %v816
        %s819 = scalar_lea.vmem [#allocation7], 128
        %v820 = vld [vmem:[%s819] sm:$0xff]
        %v821 = vld [vmem:[%s819 + $0x8] sm:$0xff]
        %v822 = vld [vmem:[%s819 + $0x10] sm:$0xff]
        %v823 = vld [vmem:[%s819 + $0x18] sm:$0xff]
        %v824 = vld [vmem:[%s819 + $0x20] sm:$0xff]
        %v825 = vld [vmem:[%s819 + $0x28] sm:$0xff]
        %v826 = vld [vmem:[%s819 + $0x30] sm:$0xff]
        %v827 = vld [vmem:[%s819 + $0x38] sm:$0xff]
        %v828 = vld [vmem:[%s819 + $0x40] sm:$0xff]
        %v829 = vld [vmem:[%s819 + $0x48] sm:$0xff]
        %v830 = vld [vmem:[%s819 + $0x50] sm:$0xff]
        %v831 = vld [vmem:[%s819 + $0x58] sm:$0xff]
        %v832 = vld [vmem:[%s819 + $0x60] sm:$0xff]
        %v833 = vld [vmem:[%s819 + $0x68] sm:$0xff]
        %v834 = vld [vmem:[%s819 + $0x70] sm:$0xff]
        %v835 = vld [vmem:[%s819 + $0x78] sm:$0xff]
        %836 = vmatprep.subr.mxu0 0.0
        %837 = vmatpush1.msra.mxu0 %v817
        %838 = vmatprep.subr.mxu0 0.0
        %839 = vmatpush1.msra.mxu0 %v818
        %840 = vmatprep.subr.mxu0 0.0
        %841 = vmatpush1.msra.mxu0 0.0
        %842 = vmatprep.subr.mxu0 0.0
        %843 = vmatpush1.msra.mxu0 0.0
        %844 = vmatprep.subr.mxu0 0.0
        %845 = vmatpush1.msra.mxu0 0.0
        %846 = vmatprep.subr.mxu0 0.0
        %847 = vmatpush1.msra.mxu0 0.0
        %848 = vmatprep.subr.mxu0 0.0
        %849 = vmatpush1.msra.mxu0 0.0
        %850 = vmatprep.subr.mxu0 0.0
        %851 = vmatpush1.msra.mxu0 0.0
        %852 = vmatprep.subr.mxu0 0.0
        %853 = vmatpush1.msra.mxu0 0.0
        %854 = vmatprep.subr.mxu0 0.0
        %855 = vmatpush1.msra.mxu0 0.0
        %856 = vmatprep.subr.mxu0 0.0
        %857 = vmatpush1.msra.mxu0 0.0
        %858 = vmatprep.subr.mxu0 0.0
        %859 = vmatpush1.msra.mxu0 0.0
        %860 = vmatprep.subr.mxu0 0.0
        %861 = vmatpush1.msra.mxu0 0.0
        %862 = vmatprep.subr.mxu0 0.0
        %863 = vmatpush1.msra.mxu0 0.0
        %864 = vmatprep.subr.mxu0 0.0
        %865 = vmatpush1.msra.mxu0 0.0
        %866 = vmatprep.subr.mxu0 0.0
        %867 = vmatpush1.msra.mxu0 0.0
        %868 = vmatprep.subr.mxu0 0.0
        %869 = vmatpush1.msra.mxu0 0.0
        %870 = vmatprep.subr.mxu0 0.0
        %871 = vmatpush1.msra.mxu0 0.0
        %872 = vmatprep.subr.mxu0 0.0
        %873 = vmatpush1.msra.mxu0 0.0
        %874 = vmatprep.subr.mxu0 0.0
        %875 = vmatpush1.msra.mxu0 0.0
        %876 = vmatprep.subr.mxu0 0.0
        %877 = vmatpush1.msra.mxu0 0.0
        %878 = vmatprep.subr.mxu0 0.0
        %879 = vmatpush1.msra.mxu0 0.0
        %880 = vmatprep.subr.mxu0 0.0
        %881 = vmatpush1.msra.mxu0 0.0
        %882 = vmatprep.subr.mxu0 0.0
        %883 = vmatpush1.msra.mxu0 0.0
        %884 = vmatprep.subr.mxu0 0.0
        %885 = vmatpush1.msra.mxu0 0.0
        %886 = vmatprep.subr.mxu0 0.0
        %887 = vmatpush1.msra.mxu0 0.0
        %888 = vmatprep.subr.mxu0 0.0
        %889 = vmatpush1.msra.mxu0 0.0
        %890 = vmatprep.subr.mxu0 0.0
        %891 = vmatpush1.msra.mxu0 0.0
        %892 = vmatprep.subr.mxu0 0.0
        %893 = vmatpush1.msra.mxu0 0.0
        %894 = vmatprep.subr.mxu0 0.0
        %895 = vmatpush1.msra.mxu0 0.0
        %896 = vmatprep.subr.mxu0 0.0
        %897 = vmatpush1.msra.mxu0 0.0
        %898 = vmatprep.subr.mxu0 0.0
        %899 = vmatpush1.msra.mxu0 0.0
        %900 = vmatprep.mubr.f32.mxu0 0.0
        %901 = vmatmul.mubr.f32.gmra.mrb[0].mxu0 %v383
        %v902 = vpop.f32.mrb[0].mxu0
        %v903 = vadd.f32 0.0, %v902
        %v904 = vpop.f32.mrb[0].mxu0
        %905 = vmatprep.mubr.f32.mxu0 0.0
        %906 = vmatmul.mubr.f32.gmra.mrb[0].mxu0 %v386
        %v907 = vpop.f32.mrb[0].mxu0
        %v908 = vadd.f32 0.0, %v907
        %v909 = vpop.f32.mrb[0].mxu0
        %910 = vdwg.mxu0
        %v911 = vld [vmem:[#allocation7] sm:$0xff]
        %v912 = vld [vmem:[#allocation7 + $0x8] sm:$0xff]
        %v913 = vld [vmem:[#allocation7 + $0x10] sm:$0xff]
        %v914 = vld [vmem:[#allocation7 + $0x18] sm:$0xff]
        %v915 = vld [vmem:[#allocation7 + $0x20] sm:$0xff]
        %v916 = vld [vmem:[#allocation7 + $0x28] sm:$0xff]
        %v917 = vld [vmem:[#allocation7 + $0x30] sm:$0xff]
        %v918 = vld [vmem:[#allocation7 + $0x38] sm:$0xff]
        %v919 = vld [vmem:[#allocation7 + $0x40] sm:$0xff]
        %v920 = vld [vmem:[#allocation7 + $0x48] sm:$0xff]
        %v921 = vld [vmem:[#allocation7 + $0x50] sm:$0xff]
        %v922 = vld [vmem:[#allocation7 + $0x58] sm:$0xff]
        %v923 = vld [vmem:[#allocation7 + $0x60] sm:$0xff]
        %v924 = vld [vmem:[#allocation7 + $0x68] sm:$0xff]
        %v925 = vld [vmem:[#allocation7 + $0x70] sm:$0xff]
        %v926 = vld [vmem:[#allocation7 + $0x78] sm:$0xff]
        %927 = vmatprep.subr.mxu0 0.0
        %928 = vmatpush1.msra.mxu0 %v911
        %929 = vmatprep.subr.mxu0 0.0
        %930 = vmatpush1.msra.mxu0 %v912
        %931 = vmatprep.subr.mxu0 0.0
        %932 = vmatpush1.msra.mxu0 %v913
        %933 = vmatprep.subr.mxu0 0.0
        %934 = vmatpush1.msra.mxu0 %v914
        %935 = vmatprep.subr.mxu0 0.0
        %936 = vmatpush1.msra.mxu0 %v915
        %937 = vmatprep.subr.mxu0 0.0
        %938 = vmatpush1.msra.mxu0 %v916
        %939 = vmatprep.subr.mxu0 0.0
        %940 = vmatpush1.msra.mxu0 %v917
        %941 = vmatprep.subr.mxu0 0.0
        %942 = vmatpush1.msra.mxu0 %v918
        %943 = vmatprep.subr.mxu0 0.0
        %944 = vmatpush1.msra.mxu0 %v919
        %945 = vmatprep.subr.mxu0 0.0
        %946 = vmatpush1.msra.mxu0 %v920
        %947 = vmatprep.subr.mxu0 0.0
        %948 = vmatpush1.msra.mxu0 %v921
        %949 = vmatprep.subr.mxu0 0.0
        %950 = vmatpush1.msra.mxu0 %v922
        %951 = vmatprep.subr.mxu0 0.0
        %952 = vmatpush1.msra.mxu0 %v923
        %953 = vmatprep.subr.mxu0 0.0
        %954 = vmatpush1.msra.mxu0 %v924
        %955 = vmatprep.subr.mxu0 0.0
        %956 = vmatpush1.msra.mxu0 %v925
        %957 = vmatprep.subr.mxu0 0.0
        %958 = vmatpush1.msra.mxu0 %v926
        %959 = vmatprep.subr.mxu0 0.0
        %960 = vmatpush1.msra.mxu0 0.0
        %961 = vmatprep.subr.mxu0 0.0
        %962 = vmatpush1.msra.mxu0 0.0
        %963 = vmatprep.subr.mxu0 0.0
        %964 = vmatpush1.msra.mxu0 0.0
        %965 = vmatprep.subr.mxu0 0.0
        %966 = vmatpush1.msra.mxu0 0.0
        %967 = vmatprep.subr.mxu0 0.0
        %968 = vmatpush1.msra.mxu0 0.0
        %969 = vmatprep.subr.mxu0 0.0
        %970 = vmatpush1.msra.mxu0 0.0
        %971 = vmatprep.subr.mxu0 0.0
        %972 = vmatpush1.msra.mxu0 0.0
        %973 = vmatprep.subr.mxu0 0.0
        %974 = vmatpush1.msra.mxu0 0.0
        %975 = vmatprep.subr.mxu0 0.0
        %976 = vmatpush1.msra.mxu0 0.0
        %977 = vmatprep.subr.mxu0 0.0
        %978 = vmatpush1.msra.mxu0 0.0
        %979 = vmatprep.subr.mxu0 0.0
        %980 = vmatpush1.msra.mxu0 0.0
        %981 = vmatprep.subr.mxu0 0.0
        %982 = vmatpush1.msra.mxu0 0.0
        %983 = vmatprep.subr.mxu0 0.0
        %984 = vmatpush1.msra.mxu0 0.0
        %985 = vmatprep.subr.mxu0 0.0
        %986 = vmatpush1.msra.mxu0 0.0
        %987 = vmatprep.subr.mxu0 0.0
        %988 = vmatpush1.msra.mxu0 0.0
        %989 = vmatprep.subr.mxu0 0.0
        %990 = vmatpush1.msra.mxu0 0.0
        %991 = vmatprep.mubr.f32.mxu0 0.0
        %992 = vmatmul.mubr.f32.gmra.mrb[0].mxu0 %v903
        %v993 = vpop.f32.mrb[0].mxu0
        %v994 = vadd.f32 0.0, %v993
        %v995 = vpop.f32.mrb[0].mxu0
        %996 = vmatprep.mubr.f32.mxu0 0.0
        %997 = vmatmul.mubr.f32.gmra.mrb[0].mxu0 %v908
        %v998 = vpop.f32.mrb[0].mxu0
        %v999 = vadd.f32 0.0, %v998
        %v1000 = vpop.f32.mrb[0].mxu0
        %1001 = vdwg.mxu0
        %1002 = vmatprep.subr.mxu0 0.0
        %1003 = vmatpush1.msra.mxu0 %v820
        %1004 = vmatprep.subr.mxu0 0.0
        %1005 = vmatpush1.msra.mxu0 %v821
        %1006 = vmatprep.subr.mxu0 0.0
        %1007 = vmatpush1.msra.mxu0 %v822
        %1008 = vmatprep.subr.mxu0 0.0
        %1009 = vmatpush1.msra.mxu0 %v823
        %1010 = vmatprep.subr.mxu0 0.0
        %1011 = vmatpush1.msra.mxu0 %v824
        %1012 = vmatprep.subr.mxu0 0.0
        %1013 = vmatpush1.msra.mxu0 %v825
        %1014 = vmatprep.subr.mxu0 0.0
        %1015 = vmatpush1.msra.mxu0 %v826
        %1016 = vmatprep.subr.mxu0 0.0
        %1017 = vmatpush1.msra.mxu0 %v827
        %1018 = vmatprep.subr.mxu0 0.0
        %1019 = vmatpush1.msra.mxu0 %v828
        %1020 = vmatprep.subr.mxu0 0.0
        %1021 = vmatpush1.msra.mxu0 %v829
        %1022 = vmatprep.subr.mxu0 0.0
        %1023 = vmatpush1.msra.mxu0 %v830
        %1024 = vmatprep.subr.mxu0 0.0
        %1025 = vmatpush1.msra.mxu0 %v831
        %1026 = vmatprep.subr.mxu0 0.0
        %1027 = vmatpush1.msra.mxu0 %v832
        %1028 = vmatprep.subr.mxu0 0.0
        %1029 = vmatpush1.msra.mxu0 %v833
        %1030 = vmatprep.subr.mxu0 0.0
        %1031 = vmatpush1.msra.mxu0 %v834
        %1032 = vmatprep.subr.mxu0 0.0
        %1033 = vmatpush1.msra.mxu0 %v835
        %1034 = vmatprep.subr.mxu0 0.0
        %1035 = vmatpush1.msra.mxu0 0.0
        %1036 = vmatprep.subr.mxu0 0.0
        %1037 = vmatpush1.msra.mxu0 0.0
        %1038 = vmatprep.subr.mxu0 0.0
        %1039 = vmatpush1.msra.mxu0 0.0
        %1040 = vmatprep.subr.mxu0 0.0
        %1041 = vmatpush1.msra.mxu0 0.0
        %1042 = vmatprep.subr.mxu0 0.0
        %1043 = vmatpush1.msra.mxu0 0.0
        %1044 = vmatprep.subr.mxu0 0.0
        %1045 = vmatpush1.msra.mxu0 0.0
        %1046 = vmatprep.subr.mxu0 0.0
        %1047 = vmatpush1.msra.mxu0 0.0
        %1048 = vmatprep.subr.mxu0 0.0
        %1049 = vmatpush1.msra.mxu0 0.0
        %1050 = vmatprep.subr.mxu0 0.0
        %1051 = vmatpush1.msra.mxu0 0.0
        %1052 = vmatprep.subr.mxu0 0.0
        %1053 = vmatpush1.msra.mxu0 0.0
        %1054 = vmatprep.subr.mxu0 0.0
        %1055 = vmatpush1.msra.mxu0 0.0
        %1056 = vmatprep.subr.mxu0 0.0
        %1057 = vmatpush1.msra.mxu0 0.0
        %1058 = vmatprep.subr.mxu0 0.0
        %1059 = vmatpush1.msra.mxu0 0.0
        %1060 = vmatprep.subr.mxu0 0.0
        %1061 = vmatpush1.msra.mxu0 0.0
        %1062 = vmatprep.subr.mxu0 0.0
        %1063 = vmatpush1.msra.mxu0 0.0
        %1064 = vmatprep.subr.mxu0 0.0
        %1065 = vmatpush1.msra.mxu0 0.0
        %1066 = vmatprep.mubr.f32.mxu0 0.0
        %1067 = vmatmul.mubr.f32.gmra.mrb[0].mxu0 %v817
        %v1068 = vpop.f32.mrb[0].mxu0
        %v1069 = vadd.f32 %v994, %v1068
        %v1070 = vpop.f32.mrb[0].mxu0
        %1071 = vmatprep.mubr.f32.mxu0 0.0
        %1072 = vmatmul.mubr.f32.gmra.mrb[0].mxu0 %v818
        %v1073 = vpop.f32.mrb[0].mxu0
        %v1074 = vadd.f32 %v999, %v1073
        %v1075 = vpop.f32.mrb[0].mxu0
        %1076 = vdwg.mxu0
        %1077 = vmatprep.subr.mxu0 0.0
        %1078 = vmatpush1.msra.mxu0 %v817
        %1079 = vmatprep.subr.mxu0 0.0
        %1080 = vmatpush1.msra.mxu0 %v818
        %1081 = vmatprep.subr.mxu0 0.0
        %1082 = vmatpush1.msra.mxu0 0.0
        %1083 = vmatprep.subr.mxu0 0.0
        %1084 = vmatpush1.msra.mxu0 0.0
        %1085 = vmatprep.subr.mxu0 0.0
        %1086 = vmatpush1.msra.mxu0 0.0
        %1087 = vmatprep.subr.mxu0 0.0
        %1088 = vmatpush1.msra.mxu0 0.0
        %1089 = vmatprep.subr.mxu0 0.0
        %1090 = vmatpush1.msra.mxu0 0.0
        %1091 = vmatprep.subr.mxu0 0.0
        %1092 = vmatpush1.msra.mxu0 0.0
        %1093 = vmatprep.subr.mxu0 0.0
        %1094 = vmatpush1.msra.mxu0 0.0
        %1095 = vmatprep.subr.mxu0 0.0
        %1096 = vmatpush1.msra.mxu0 0.0
        %1097 = vmatprep.subr.mxu0 0.0
        %1098 = vmatpush1.msra.mxu0 0.0
        %1099 = vmatprep.subr.mxu0 0.0
        %1100 = vmatpush1.msra.mxu0 0.0
        %1101 = vmatprep.subr.mxu0 0.0
        %1102 = vmatpush1.msra.mxu0 0.0
        %1103 = vmatprep.subr.mxu0 0.0
        %1104 = vmatpush1.msra.mxu0 0.0
        %1105 = vmatprep.subr.mxu0 0.0
        %1106 = vmatpush1.msra.mxu0 0.0
        %1107 = vmatprep.subr.mxu0 0.0
        %1108 = vmatpush1.msra.mxu0 0.0
        %1109 = vmatprep.subr.mxu0 0.0
        %1110 = vmatpush1.msra.mxu0 0.0
        %1111 = vmatprep.subr.mxu0 0.0
        %1112 = vmatpush1.msra.mxu0 0.0
        %1113 = vmatprep.subr.mxu0 0.0
        %1114 = vmatpush1.msra.mxu0 0.0
        %1115 = vmatprep.subr.mxu0 0.0
        %1116 = vmatpush1.msra.mxu0 0.0
        %1117 = vmatprep.subr.mxu0 0.0
        %1118 = vmatpush1.msra.mxu0 0.0
        %1119 = vmatprep.subr.mxu0 0.0
        %1120 = vmatpush1.msra.mxu0 0.0
        %1121 = vmatprep.subr.mxu0 0.0
        %1122 = vmatpush1.msra.mxu0 0.0
        %1123 = vmatprep.subr.mxu0 0.0
        %1124 = vmatpush1.msra.mxu0 0.0
        %1125 = vmatprep.subr.mxu0 0.0
        %1126 = vmatpush1.msra.mxu0 0.0
        %1127 = vmatprep.subr.mxu0 0.0
        %1128 = vmatpush1.msra.mxu0 0.0
        %1129 = vmatprep.subr.mxu0 0.0
        %1130 = vmatpush1.msra.mxu0 0.0
        %1131 = vmatprep.subr.mxu0 0.0
        %1132 = vmatpush1.msra.mxu0 0.0
        %1133 = vmatprep.subr.mxu0 0.0
        %1134 = vmatpush1.msra.mxu0 0.0
        %1135 = vmatprep.subr.mxu0 0.0
        %1136 = vmatpush1.msra.mxu0 0.0
        %1137 = vmatprep.subr.mxu0 0.0
        %1138 = vmatpush1.msra.mxu0 0.0
        %1139 = vmatprep.subr.mxu0 0.0
        %1140 = vmatpush1.msra.mxu0 0.0
        %1141 = vmatprep.mubr.f32.mxu0 0.0
        %1142 = vmatmul.mubr.f32.gmra.mrb[0].mxu0 %v630
        %v1143 = vpop.f32.mrb[0].mxu0
        %v1144 = vadd.f32 0.0, %v1143
        %v1145 = vpop.f32.mrb[0].mxu0
        %1146 = vmatprep.mubr.f32.mxu0 0.0
        %1147 = vmatmul.mubr.f32.gmra.mrb[0].mxu0 %v633
        %v1148 = vpop.f32.mrb[0].mxu0
        %v1149 = vadd.f32 0.0, %v1148
        %v1150 = vpop.f32.mrb[0].mxu0
        %1151 = vdwg.mxu0
        %s1152 = scalar_lea.vmem [#allocation7], 256
        %v1153 = vld [vmem:[%s1152] sm:$0xff]
        %v1154 = vld [vmem:[%s1152 + $0x8] sm:$0xff]
        %v1155 = vld [vmem:[%s1152 + $0x10] sm:$0xff]
        %v1156 = vld [vmem:[%s1152 + $0x18] sm:$0xff]
        %v1157 = vld [vmem:[%s1152 + $0x20] sm:$0xff]
        %v1158 = vld [vmem:[%s1152 + $0x28] sm:$0xff]
        %v1159 = vld [vmem:[%s1152 + $0x30] sm:$0xff]
        %v1160 = vld [vmem:[%s1152 + $0x38] sm:$0xff]
        %v1161 = vld [vmem:[%s1152 + $0x40] sm:$0xff]
        %v1162 = vld [vmem:[%s1152 + $0x48] sm:$0xff]
        %v1163 = vld [vmem:[%s1152 + $0x50] sm:$0xff]
        %v1164 = vld [vmem:[%s1152 + $0x58] sm:$0xff]
        %v1165 = vld [vmem:[%s1152 + $0x60] sm:$0xff]
        %v1166 = vld [vmem:[%s1152 + $0x68] sm:$0xff]
        %v1167 = vld [vmem:[%s1152 + $0x70] sm:$0xff]
        %v1168 = vld [vmem:[%s1152 + $0x78] sm:$0xff]
        %1169 = vmatprep.subr.mxu0 0.0
        %1170 = vmatpush1.msra.mxu0 %v1153
        %1171 = vmatprep.subr.mxu0 0.0
        %1172 = vmatpush1.msra.mxu0 %v1154
        %1173 = vmatprep.subr.mxu0 0.0
        %1174 = vmatpush1.msra.mxu0 %v1155
        %1175 = vmatprep.subr.mxu0 0.0
        %1176 = vmatpush1.msra.mxu0 %v1156
        %1177 = vmatprep.subr.mxu0 0.0
        %1178 = vmatpush1.msra.mxu0 %v1157
        %1179 = vmatprep.subr.mxu0 0.0
        %1180 = vmatpush1.msra.mxu0 %v1158
        %1181 = vmatprep.subr.mxu0 0.0
        %1182 = vmatpush1.msra.mxu0 %v1159
        %1183 = vmatprep.subr.mxu0 0.0
        %1184 = vmatpush1.msra.mxu0 %v1160
        %1185 = vmatprep.subr.mxu0 0.0
        %1186 = vmatpush1.msra.mxu0 %v1161
        %1187 = vmatprep.subr.mxu0 0.0
        %1188 = vmatpush1.msra.mxu0 %v1162
        %1189 = vmatprep.subr.mxu0 0.0
        %1190 = vmatpush1.msra.mxu0 %v1163
        %1191 = vmatprep.subr.mxu0 0.0
        %1192 = vmatpush1.msra.mxu0 %v1164
        %1193 = vmatprep.subr.mxu0 0.0
        %1194 = vmatpush1.msra.mxu0 %v1165
        %1195 = vmatprep.subr.mxu0 0.0
        %1196 = vmatpush1.msra.mxu0 %v1166
        %1197 = vmatprep.subr.mxu0 0.0
        %1198 = vmatpush1.msra.mxu0 %v1167
        %1199 = vmatprep.subr.mxu0 0.0
        %1200 = vmatpush1.msra.mxu0 %v1168
        %1201 = vmatprep.subr.mxu0 0.0
        %1202 = vmatpush1.msra.mxu0 0.0
        %1203 = vmatprep.subr.mxu0 0.0
        %1204 = vmatpush1.msra.mxu0 0.0
        %1205 = vmatprep.subr.mxu0 0.0
        %1206 = vmatpush1.msra.mxu0 0.0
        %1207 = vmatprep.subr.mxu0 0.0
        %1208 = vmatpush1.msra.mxu0 0.0
        %1209 = vmatprep.subr.mxu0 0.0
        %1210 = vmatpush1.msra.mxu0 0.0
        %1211 = vmatprep.subr.mxu0 0.0
        %1212 = vmatpush1.msra.mxu0 0.0
        %1213 = vmatprep.subr.mxu0 0.0
        %1214 = vmatpush1.msra.mxu0 0.0
        %1215 = vmatprep.subr.mxu0 0.0
        %1216 = vmatpush1.msra.mxu0 0.0
        %1217 = vmatprep.subr.mxu0 0.0
        %1218 = vmatpush1.msra.mxu0 0.0
        %1219 = vmatprep.subr.mxu0 0.0
        %1220 = vmatpush1.msra.mxu0 0.0
        %1221 = vmatprep.subr.mxu0 0.0
        %1222 = vmatpush1.msra.mxu0 0.0
        %1223 = vmatprep.subr.mxu0 0.0
        %1224 = vmatpush1.msra.mxu0 0.0
        %1225 = vmatprep.subr.mxu0 0.0
        %1226 = vmatpush1.msra.mxu0 0.0
        %1227 = vmatprep.subr.mxu0 0.0
        %1228 = vmatpush1.msra.mxu0 0.0
        %1229 = vmatprep.subr.mxu0 0.0
        %1230 = vmatpush1.msra.mxu0 0.0
        %1231 = vmatprep.subr.mxu0 0.0
        %1232 = vmatpush1.msra.mxu0 0.0
        %1233 = vmatprep.mubr.f32.mxu0 0.0
        %1234 = vmatmul.mubr.f32.gmra.mrb[0].mxu0 %v1144
        %v1235 = vpop.f32.mrb[0].mxu0
        %v1236 = vadd.f32 0.0, %v1235
        %v1237 = vpop.f32.mrb[0].mxu0
        %1238 = vmatprep.mubr.f32.mxu0 0.0
        %1239 = vmatmul.mubr.f32.gmra.mrb[0].mxu0 %v1149
        %v1240 = vpop.f32.mrb[0].mxu0
        %v1241 = vadd.f32 0.0, %v1240
        %v1242 = vpop.f32.mrb[0].mxu0
        %1243 = vdwg.mxu0
        %v1244 = vadd.f32 %v1069, %v1236
        %v1245 = vadd.f32 %v1074, %v1241
        %v1246 = vld [vmem:[%s4] sm:$0x1]
        %v1248 = vlaneseq
        %v1249 = vshrl.u32 %v1248, 7
        %v1250 = vsub.s32 0, %v1249
        %v1251 = vrot.slane %v1246, %v1250
        %v1253 = vadd.f32 %v1244, %v1251
        %v1254 = vadd.f32 %v1245, %v1251
        %vm1255 = vcmp.gt.f32.partialorder %v1253, 0.0
        %vm1256 = vcmp.gt.f32.partialorder %v1254, 0.0
        %v1257 = vmul.f32 %v1253, 0.1
        %v1258 = vmul.f32 %v1254, 0.1
        %v1259 = vsel %vm1255, %v1253, %v1257
        %v1260 = vsel %vm1256, %v1254, %v1258
        %s1261 = scalar_lea.vmem [#allocation8], 128
        %v1262 = vld [vmem:[%s1261] sm:$0xff]
        %v1263 = vld [vmem:[%s1261 + $0x8] sm:$0xff]
        %v1264 = vld [vmem:[%s1261 + $0x10] sm:$0xff]
        %v1265 = vld [vmem:[%s1261 + $0x18] sm:$0xff]
        %v1266 = vld [vmem:[%s1261 + $0x20] sm:$0xff]
        %v1267 = vld [vmem:[%s1261 + $0x28] sm:$0xff]
        %v1268 = vld [vmem:[%s1261 + $0x30] sm:$0xff]
        %v1269 = vld [vmem:[%s1261 + $0x38] sm:$0xff]
        %v1270 = vld [vmem:[%s1261 + $0x40] sm:$0xff]
        %v1271 = vld [vmem:[%s1261 + $0x48] sm:$0xff]
        %v1272 = vld [vmem:[%s1261 + $0x50] sm:$0xff]
        %v1273 = vld [vmem:[%s1261 + $0x58] sm:$0xff]
        %v1274 = vld [vmem:[%s1261 + $0x60] sm:$0xff]
        %v1275 = vld [vmem:[%s1261 + $0x68] sm:$0xff]
        %v1276 = vld [vmem:[%s1261 + $0x70] sm:$0xff]
        %v1277 = vld [vmem:[%s1261 + $0x78] sm:$0xff]
        %1278 = vmatprep.subr.mxu0 0.0
        %1279 = vmatpush1.msra.mxu0 %v1259
        %1280 = vmatprep.subr.mxu0 0.0
        %1281 = vmatpush1.msra.mxu0 %v1260
        %1282 = vmatprep.subr.mxu0 0.0
        %1283 = vmatpush1.msra.mxu0 0.0
        %1284 = vmatprep.subr.mxu0 0.0
        %1285 = vmatpush1.msra.mxu0 0.0
        %1286 = vmatprep.subr.mxu0 0.0
        %1287 = vmatpush1.msra.mxu0 0.0
        %1288 = vmatprep.subr.mxu0 0.0
        %1289 = vmatpush1.msra.mxu0 0.0
        %1290 = vmatprep.subr.mxu0 0.0
        %1291 = vmatpush1.msra.mxu0 0.0
        %1292 = vmatprep.subr.mxu0 0.0
        %1293 = vmatpush1.msra.mxu0 0.0
        %1294 = vmatprep.subr.mxu0 0.0
        %1295 = vmatpush1.msra.mxu0 0.0
        %1296 = vmatprep.subr.mxu0 0.0
        %1297 = vmatpush1.msra.mxu0 0.0
        %1298 = vmatprep.subr.mxu0 0.0
        %1299 = vmatpush1.msra.mxu0 0.0
        %1300 = vmatprep.subr.mxu0 0.0
        %1301 = vmatpush1.msra.mxu0 0.0
        %1302 = vmatprep.subr.mxu0 0.0
        %1303 = vmatpush1.msra.mxu0 0.0
        %1304 = vmatprep.subr.mxu0 0.0
        %1305 = vmatpush1.msra.mxu0 0.0
        %1306 = vmatprep.subr.mxu0 0.0
        %1307 = vmatpush1.msra.mxu0 0.0
        %1308 = vmatprep.subr.mxu0 0.0
        %1309 = vmatpush1.msra.mxu0 0.0
        %1310 = vmatprep.subr.mxu0 0.0
        %1311 = vmatpush1.msra.mxu0 0.0
        %1312 = vmatprep.subr.mxu0 0.0
        %1313 = vmatpush1.msra.mxu0 0.0
        %1314 = vmatprep.subr.mxu0 0.0
        %1315 = vmatpush1.msra.mxu0 0.0
        %1316 = vmatprep.subr.mxu0 0.0
        %1317 = vmatpush1.msra.mxu0 0.0
        %1318 = vmatprep.subr.mxu0 0.0
        %1319 = vmatpush1.msra.mxu0 0.0
        %1320 = vmatprep.subr.mxu0 0.0
        %1321 = vmatpush1.msra.mxu0 0.0
        %1322 = vmatprep.subr.mxu0 0.0
        %1323 = vmatpush1.msra.mxu0 0.0
        %1324 = vmatprep.subr.mxu0 0.0
        %1325 = vmatpush1.msra.mxu0 0.0
        %1326 = vmatprep.subr.mxu0 0.0
        %1327 = vmatpush1.msra.mxu0 0.0
        %1328 = vmatprep.subr.mxu0 0.0
        %1329 = vmatpush1.msra.mxu0 0.0
        %1330 = vmatprep.subr.mxu0 0.0
        %1331 = vmatpush1.msra.mxu0 0.0
        %1332 = vmatprep.subr.mxu0 0.0
        %1333 = vmatpush1.msra.mxu0 0.0
        %1334 = vmatprep.subr.mxu0 0.0
        %1335 = vmatpush1.msra.mxu0 0.0
        %1336 = vmatprep.subr.mxu0 0.0
        %1337 = vmatpush1.msra.mxu0 0.0
        %1338 = vmatprep.subr.mxu0 0.0
        %1339 = vmatpush1.msra.mxu0 0.0
        %1340 = vmatprep.subr.mxu0 0.0
        %1341 = vmatpush1.msra.mxu0 0.0
        %1342 = vmatprep.mubr.f32.mxu0 0.0
        %1343 = vmatmul.mubr.f32.gmra.mrb[0].mxu0 %v383
        %v1344 = vpop.f32.mrb[0].mxu0
        %v1345 = vadd.f32 0.0, %v1344
        %v1346 = vpop.f32.mrb[0].mxu0
        %1347 = vmatprep.mubr.f32.mxu0 0.0
        %1348 = vmatmul.mubr.f32.gmra.mrb[0].mxu0 %v386
        %v1349 = vpop.f32.mrb[0].mxu0
        %v1350 = vadd.f32 0.0, %v1349
        %v1351 = vpop.f32.mrb[0].mxu0
        %1352 = vdwg.mxu0
        %v1353 = vld [vmem:[#allocation8] sm:$0xff]
        %v1354 = vld [vmem:[#allocation8 + $0x8] sm:$0xff]
        %v1355 = vld [vmem:[#allocation8 + $0x10] sm:$0xff]
        %v1356 = vld [vmem:[#allocation8 + $0x18] sm:$0xff]
        %v1357 = vld [vmem:[#allocation8 + $0x20] sm:$0xff]
        %v1358 = vld [vmem:[#allocation8 + $0x28] sm:$0xff]
        %v1359 = vld [vmem:[#allocation8 + $0x30] sm:$0xff]
        %v1360 = vld [vmem:[#allocation8 + $0x38] sm:$0xff]
        %v1361 = vld [vmem:[#allocation8 + $0x40] sm:$0xff]
        %v1362 = vld [vmem:[#allocation8 + $0x48] sm:$0xff]
        %v1363 = vld [vmem:[#allocation8 + $0x50] sm:$0xff]
        %v1364 = vld [vmem:[#allocation8 + $0x58] sm:$0xff]
        %v1365 = vld [vmem:[#allocation8 + $0x60] sm:$0xff]
        %v1366 = vld [vmem:[#allocation8 + $0x68] sm:$0xff]
        %v1367 = vld [vmem:[#allocation8 + $0x70] sm:$0xff]
        %v1368 = vld [vmem:[#allocation8 + $0x78] sm:$0xff]
        %1369 = vmatprep.subr.mxu0 0.0
        %1370 = vmatpush1.msra.mxu0 %v1353
        %1371 = vmatprep.subr.mxu0 0.0
        %1372 = vmatpush1.msra.mxu0 %v1354
        %1373 = vmatprep.subr.mxu0 0.0
        %1374 = vmatpush1.msra.mxu0 %v1355
        %1375 = vmatprep.subr.mxu0 0.0
        %1376 = vmatpush1.msra.mxu0 %v1356
        %1377 = vmatprep.subr.mxu0 0.0
        %1378 = vmatpush1.msra.mxu0 %v1357
        %1379 = vmatprep.subr.mxu0 0.0
        %1380 = vmatpush1.msra.mxu0 %v1358
        %1381 = vmatprep.subr.mxu0 0.0
        %1382 = vmatpush1.msra.mxu0 %v1359
        %1383 = vmatprep.subr.mxu0 0.0
        %1384 = vmatpush1.msra.mxu0 %v1360
        %1385 = vmatprep.subr.mxu0 0.0
        %1386 = vmatpush1.msra.mxu0 %v1361
        %1387 = vmatprep.subr.mxu0 0.0
        %1388 = vmatpush1.msra.mxu0 %v1362
        %1389 = vmatprep.subr.mxu0 0.0
        %1390 = vmatpush1.msra.mxu0 %v1363
        %1391 = vmatprep.subr.mxu0 0.0
        %1392 = vmatpush1.msra.mxu0 %v1364
        %1393 = vmatprep.subr.mxu0 0.0
        %1394 = vmatpush1.msra.mxu0 %v1365
        %1395 = vmatprep.subr.mxu0 0.0
        %1396 = vmatpush1.msra.mxu0 %v1366
        %1397 = vmatprep.subr.mxu0 0.0
        %1398 = vmatpush1.msra.mxu0 %v1367
        %1399 = vmatprep.subr.mxu0 0.0
        %1400 = vmatpush1.msra.mxu0 %v1368
        %1401 = vmatprep.subr.mxu0 0.0
        %1402 = vmatpush1.msra.mxu0 0.0
        %1403 = vmatprep.subr.mxu0 0.0
        %1404 = vmatpush1.msra.mxu0 0.0
        %1405 = vmatprep.subr.mxu0 0.0
        %1406 = vmatpush1.msra.mxu0 0.0
        %1407 = vmatprep.subr.mxu0 0.0
        %1408 = vmatpush1.msra.mxu0 0.0
        %1409 = vmatprep.subr.mxu0 0.0
        %1410 = vmatpush1.msra.mxu0 0.0
        %1411 = vmatprep.subr.mxu0 0.0
        %1412 = vmatpush1.msra.mxu0 0.0
        %1413 = vmatprep.subr.mxu0 0.0
        %1414 = vmatpush1.msra.mxu0 0.0
        %1415 = vmatprep.subr.mxu0 0.0
        %1416 = vmatpush1.msra.mxu0 0.0
        %1417 = vmatprep.subr.mxu0 0.0
        %1418 = vmatpush1.msra.mxu0 0.0
        %1419 = vmatprep.subr.mxu0 0.0
        %1420 = vmatpush1.msra.mxu0 0.0
        %1421 = vmatprep.subr.mxu0 0.0
        %1422 = vmatpush1.msra.mxu0 0.0
        %1423 = vmatprep.subr.mxu0 0.0
        %1424 = vmatpush1.msra.mxu0 0.0
        %1425 = vmatprep.subr.mxu0 0.0
        %1426 = vmatpush1.msra.mxu0 0.0
        %1427 = vmatprep.subr.mxu0 0.0
        %1428 = vmatpush1.msra.mxu0 0.0
        %1429 = vmatprep.subr.mxu0 0.0
        %1430 = vmatpush1.msra.mxu0 0.0
        %1431 = vmatprep.subr.mxu0 0.0
        %1432 = vmatpush1.msra.mxu0 0.0
        %1433 = vmatprep.mubr.f32.mxu0 0.0
        %1434 = vmatmul.mubr.f32.gmra.mrb[0].mxu0 %v1345
        %v1435 = vpop.f32.mrb[0].mxu0
        %v1436 = vadd.f32 0.0, %v1435
        %v1437 = vpop.f32.mrb[0].mxu0
        %1438 = vmatprep.mubr.f32.mxu0 0.0
        %1439 = vmatmul.mubr.f32.gmra.mrb[0].mxu0 %v1350
        %v1440 = vpop.f32.mrb[0].mxu0
        %v1441 = vadd.f32 0.0, %v1440
        %v1442 = vpop.f32.mrb[0].mxu0
        %1443 = vdwg.mxu0
        %1444 = vmatprep.subr.mxu0 0.0
        %1445 = vmatpush1.msra.mxu0 %v1262
        %1446 = vmatprep.subr.mxu0 0.0
        %1447 = vmatpush1.msra.mxu0 %v1263
        %1448 = vmatprep.subr.mxu0 0.0
        %1449 = vmatpush1.msra.mxu0 %v1264
        %1450 = vmatprep.subr.mxu0 0.0
        %1451 = vmatpush1.msra.mxu0 %v1265
        %1452 = vmatprep.subr.mxu0 0.0
        %1453 = vmatpush1.msra.mxu0 %v1266
        %1454 = vmatprep.subr.mxu0 0.0
        %1455 = vmatpush1.msra.mxu0 %v1267
        %1456 = vmatprep.subr.mxu0 0.0
        %1457 = vmatpush1.msra.mxu0 %v1268
        %1458 = vmatprep.subr.mxu0 0.0
        %1459 = vmatpush1.msra.mxu0 %v1269
        %1460 = vmatprep.subr.mxu0 0.0
        %1461 = vmatpush1.msra.mxu0 %v1270
        %1462 = vmatprep.subr.mxu0 0.0
        %1463 = vmatpush1.msra.mxu0 %v1271
        %1464 = vmatprep.subr.mxu0 0.0
        %1465 = vmatpush1.msra.mxu0 %v1272
        %1466 = vmatprep.subr.mxu0 0.0
        %1467 = vmatpush1.msra.mxu0 %v1273
        %1468 = vmatprep.subr.mxu0 0.0
        %1469 = vmatpush1.msra.mxu0 %v1274
        %1470 = vmatprep.subr.mxu0 0.0
        %1471 = vmatpush1.msra.mxu0 %v1275
        %1472 = vmatprep.subr.mxu0 0.0
        %1473 = vmatpush1.msra.mxu0 %v1276
        %1474 = vmatprep.subr.mxu0 0.0
        %1475 = vmatpush1.msra.mxu0 %v1277
        %1476 = vmatprep.subr.mxu0 0.0
        %1477 = vmatpush1.msra.mxu0 0.0
        %1478 = vmatprep.subr.mxu0 0.0
        %1479 = vmatpush1.msra.mxu0 0.0
        %1480 = vmatprep.subr.mxu0 0.0
        %1481 = vmatpush1.msra.mxu0 0.0
        %1482 = vmatprep.subr.mxu0 0.0
        %1483 = vmatpush1.msra.mxu0 0.0
        %1484 = vmatprep.subr.mxu0 0.0
        %1485 = vmatpush1.msra.mxu0 0.0
        %1486 = vmatprep.subr.mxu0 0.0
        %1487 = vmatpush1.msra.mxu0 0.0
        %1488 = vmatprep.subr.mxu0 0.0
        %1489 = vmatpush1.msra.mxu0 0.0
        %1490 = vmatprep.subr.mxu0 0.0
        %1491 = vmatpush1.msra.mxu0 0.0
        %1492 = vmatprep.subr.mxu0 0.0
        %1493 = vmatpush1.msra.mxu0 0.0
        %1494 = vmatprep.subr.mxu0 0.0
        %1495 = vmatpush1.msra.mxu0 0.0
        %1496 = vmatprep.subr.mxu0 0.0
        %1497 = vmatpush1.msra.mxu0 0.0
        %1498 = vmatprep.subr.mxu0 0.0
        %1499 = vmatpush1.msra.mxu0 0.0
        %1500 = vmatprep.subr.mxu0 0.0
        %1501 = vmatpush1.msra.mxu0 0.0
        %1502 = vmatprep.subr.mxu0 0.0
        %1503 = vmatpush1.msra.mxu0 0.0
        %1504 = vmatprep.subr.mxu0 0.0
        %1505 = vmatpush1.msra.mxu0 0.0
        %1506 = vmatprep.subr.mxu0 0.0
        %1507 = vmatpush1.msra.mxu0 0.0
        %1508 = vmatprep.mubr.f32.mxu0 0.0
        %1509 = vmatmul.mubr.f32.gmra.mrb[0].mxu0 %v1259
        %v1510 = vpop.f32.mrb[0].mxu0
        %v1511 = vadd.f32 %v1436, %v1510
        %v1512 = vpop.f32.mrb[0].mxu0
        %1513 = vmatprep.mubr.f32.mxu0 0.0
        %1514 = vmatmul.mubr.f32.gmra.mrb[0].mxu0 %v1260
        %v1515 = vpop.f32.mrb[0].mxu0
        %v1516 = vadd.f32 %v1441, %v1515
        %v1517 = vpop.f32.mrb[0].mxu0
        %1518 = vdwg.mxu0
        %1519 = vmatprep.subr.mxu0 0.0
        %1520 = vmatpush1.msra.mxu0 %v1259
        %1521 = vmatprep.subr.mxu0 0.0
        %1522 = vmatpush1.msra.mxu0 %v1260
        %1523 = vmatprep.subr.mxu0 0.0
        %1524 = vmatpush1.msra.mxu0 0.0
        %1525 = vmatprep.subr.mxu0 0.0
        %1526 = vmatpush1.msra.mxu0 0.0
        %1527 = vmatprep.subr.mxu0 0.0
        %1528 = vmatpush1.msra.mxu0 0.0
        %1529 = vmatprep.subr.mxu0 0.0
        %1530 = vmatpush1.msra.mxu0 0.0
        %1531 = vmatprep.subr.mxu0 0.0
        %1532 = vmatpush1.msra.mxu0 0.0
        %1533 = vmatprep.subr.mxu0 0.0
        %1534 = vmatpush1.msra.mxu0 0.0
        %1535 = vmatprep.subr.mxu0 0.0
        %1536 = vmatpush1.msra.mxu0 0.0
        %1537 = vmatprep.subr.mxu0 0.0
        %1538 = vmatpush1.msra.mxu0 0.0
        %1539 = vmatprep.subr.mxu0 0.0
        %1540 = vmatpush1.msra.mxu0 0.0
        %1541 = vmatprep.subr.mxu0 0.0
        %1542 = vmatpush1.msra.mxu0 0.0
        %1543 = vmatprep.subr.mxu0 0.0
        %1544 = vmatpush1.msra.mxu0 0.0
        %1545 = vmatprep.subr.mxu0 0.0
        %1546 = vmatpush1.msra.mxu0 0.0
        %1547 = vmatprep.subr.mxu0 0.0
        %1548 = vmatpush1.msra.mxu0 0.0
        %1549 = vmatprep.subr.mxu0 0.0
        %1550 = vmatpush1.msra.mxu0 0.0
        %1551 = vmatprep.subr.mxu0 0.0
        %1552 = vmatpush1.msra.mxu0 0.0
        %1553 = vmatprep.subr.mxu0 0.0
        %1554 = vmatpush1.msra.mxu0 0.0
        %1555 = vmatprep.subr.mxu0 0.0
        %1556 = vmatpush1.msra.mxu0 0.0
        %1557 = vmatprep.subr.mxu0 0.0
        %1558 = vmatpush1.msra.mxu0 0.0
        %1559 = vmatprep.subr.mxu0 0.0
        %1560 = vmatpush1.msra.mxu0 0.0
        %1561 = vmatprep.subr.mxu0 0.0
        %1562 = vmatpush1.msra.mxu0 0.0
        %1563 = vmatprep.subr.mxu0 0.0
        %1564 = vmatpush1.msra.mxu0 0.0
        %1565 = vmatprep.subr.mxu0 0.0
        %1566 = vmatpush1.msra.mxu0 0.0
        %1567 = vmatprep.subr.mxu0 0.0
        %1568 = vmatpush1.msra.mxu0 0.0
        %1569 = vmatprep.subr.mxu0 0.0
        %1570 = vmatpush1.msra.mxu0 0.0
        %1571 = vmatprep.subr.mxu0 0.0
        %1572 = vmatpush1.msra.mxu0 0.0
        %1573 = vmatprep.subr.mxu0 0.0
        %1574 = vmatpush1.msra.mxu0 0.0
        %1575 = vmatprep.subr.mxu0 0.0
        %1576 = vmatpush1.msra.mxu0 0.0
        %1577 = vmatprep.subr.mxu0 0.0
        %1578 = vmatpush1.msra.mxu0 0.0
        %1579 = vmatprep.subr.mxu0 0.0
        %1580 = vmatpush1.msra.mxu0 0.0
        %1581 = vmatprep.subr.mxu0 0.0
        %1582 = vmatpush1.msra.mxu0 0.0
        %1583 = vmatprep.mubr.f32.mxu0 0.0
        %1584 = vmatmul.mubr.f32.gmra.mrb[0].mxu0 %v630
        %v1585 = vpop.f32.mrb[0].mxu0
        %v1586 = vadd.f32 0.0, %v1585
        %v1587 = vpop.f32.mrb[0].mxu0
        %1588 = vmatprep.mubr.f32.mxu0 0.0
        %1589 = vmatmul.mubr.f32.gmra.mrb[0].mxu0 %v633
        %v1590 = vpop.f32.mrb[0].mxu0
        %v1591 = vadd.f32 0.0, %v1590
        %v1592 = vpop.f32.mrb[0].mxu0
        %1593 = vdwg.mxu0
        %s1594 = scalar_lea.vmem [#allocation8], 256
        %v1595 = vld [vmem:[%s1594] sm:$0xff]
        %v1596 = vld [vmem:[%s1594 + $0x8] sm:$0xff]
        %v1597 = vld [vmem:[%s1594 + $0x10] sm:$0xff]
        %v1598 = vld [vmem:[%s1594 + $0x18] sm:$0xff]
        %v1599 = vld [vmem:[%s1594 + $0x20] sm:$0xff]
        %v1600 = vld [vmem:[%s1594 + $0x28] sm:$0xff]
        %v1601 = vld [vmem:[%s1594 + $0x30] sm:$0xff]
        %v1602 = vld [vmem:[%s1594 + $0x38] sm:$0xff]
        %v1603 = vld [vmem:[%s1594 + $0x40] sm:$0xff]
        %v1604 = vld [vmem:[%s1594 + $0x48] sm:$0xff]
        %v1605 = vld [vmem:[%s1594 + $0x50] sm:$0xff]
        %v1606 = vld [vmem:[%s1594 + $0x58] sm:$0xff]
        %v1607 = vld [vmem:[%s1594 + $0x60] sm:$0xff]
        %v1608 = vld [vmem:[%s1594 + $0x68] sm:$0xff]
        %v1609 = vld [vmem:[%s1594 + $0x70] sm:$0xff]
        %v1610 = vld [vmem:[%s1594 + $0x78] sm:$0xff]
        %1611 = vmatprep.subr.mxu0 0.0
        %1612 = vmatpush1.msra.mxu0 %v1595
        %1613 = vmatprep.subr.mxu0 0.0
        %1614 = vmatpush1.msra.mxu0 %v1596
        %1615 = vmatprep.subr.mxu0 0.0
        %1616 = vmatpush1.msra.mxu0 %v1597
        %1617 = vmatprep.subr.mxu0 0.0
        %1618 = vmatpush1.msra.mxu0 %v1598
        %1619 = vmatprep.subr.mxu0 0.0
        %1620 = vmatpush1.msra.mxu0 %v1599
        %1621 = vmatprep.subr.mxu0 0.0
        %1622 = vmatpush1.msra.mxu0 %v1600
        %1623 = vmatprep.subr.mxu0 0.0
        %1624 = vmatpush1.msra.mxu0 %v1601
        %1625 = vmatprep.subr.mxu0 0.0
        %1626 = vmatpush1.msra.mxu0 %v1602
        %1627 = vmatprep.subr.mxu0 0.0
        %1628 = vmatpush1.msra.mxu0 %v1603
        %1629 = vmatprep.subr.mxu0 0.0
        %1630 = vmatpush1.msra.mxu0 %v1604
        %1631 = vmatprep.subr.mxu0 0.0
        %1632 = vmatpush1.msra.mxu0 %v1605
        %1633 = vmatprep.subr.mxu0 0.0
        %1634 = vmatpush1.msra.mxu0 %v1606
        %1635 = vmatprep.subr.mxu0 0.0
        %1636 = vmatpush1.msra.mxu0 %v1607
        %1637 = vmatprep.subr.mxu0 0.0
        %1638 = vmatpush1.msra.mxu0 %v1608
        %1639 = vmatprep.subr.mxu0 0.0
        %1640 = vmatpush1.msra.mxu0 %v1609
        %1641 = vmatprep.subr.mxu0 0.0
        %1642 = vmatpush1.msra.mxu0 %v1610
        %1643 = vmatprep.subr.mxu0 0.0
        %1644 = vmatpush1.msra.mxu0 0.0
        %1645 = vmatprep.subr.mxu0 0.0
        %1646 = vmatpush1.msra.mxu0 0.0
        %1647 = vmatprep.subr.mxu0 0.0
        %1648 = vmatpush1.msra.mxu0 0.0
        %1649 = vmatprep.subr.mxu0 0.0
        %1650 = vmatpush1.msra.mxu0 0.0
        %1651 = vmatprep.subr.mxu0 0.0
        %1652 = vmatpush1.msra.mxu0 0.0
        %1653 = vmatprep.subr.mxu0 0.0
        %1654 = vmatpush1.msra.mxu0 0.0
        %1655 = vmatprep.subr.mxu0 0.0
        %1656 = vmatpush1.msra.mxu0 0.0
        %1657 = vmatprep.subr.mxu0 0.0
        %1658 = vmatpush1.msra.mxu0 0.0
        %1659 = vmatprep.subr.mxu0 0.0
        %1660 = vmatpush1.msra.mxu0 0.0
        %1661 = vmatprep.subr.mxu0 0.0
        %1662 = vmatpush1.msra.mxu0 0.0
        %1663 = vmatprep.subr.mxu0 0.0
        %1664 = vmatpush1.msra.mxu0 0.0
        %1665 = vmatprep.subr.mxu0 0.0
        %1666 = vmatpush1.msra.mxu0 0.0
        %1667 = vmatprep.subr.mxu0 0.0
        %1668 = vmatpush1.msra.mxu0 0.0
        %1669 = vmatprep.subr.mxu0 0.0
        %1670 = vmatpush1.msra.mxu0 0.0
        %1671 = vmatprep.subr.mxu0 0.0
        %1672 = vmatpush1.msra.mxu0 0.0
        %1673 = vmatprep.subr.mxu0 0.0
        %1674 = vmatpush1.msra.mxu0 0.0
        %1675 = vmatprep.mubr.f32.mxu0 0.0
        %1676 = vmatmul.mubr.f32.gmra.mrb[0].mxu0 %v1586
        %v1677 = vpop.f32.mrb[0].mxu0
        %v1678 = vadd.f32 0.0, %v1677
        %v1679 = vpop.f32.mrb[0].mxu0
        %1680 = vmatprep.mubr.f32.mxu0 0.0
        %1681 = vmatmul.mubr.f32.gmra.mrb[0].mxu0 %v1591
        %v1682 = vpop.f32.mrb[0].mxu0
        %v1683 = vadd.f32 0.0, %v1682
        %v1684 = vpop.f32.mrb[0].mxu0
        %1685 = vdwg.mxu0
        %v1686 = vadd.f32 %v1511, %v1678
        %v1687 = vadd.f32 %v1516, %v1683
        %v1688 = vld [vmem:[%s6] sm:$0x1]
        %v1690 = vlaneseq
        %v1691 = vshrl.u32 %v1690, 7
        %v1692 = vsub.s32 0, %v1691
        %v1693 = vrot.slane %v1688, %v1692
        %v1695 = vadd.f32 %v1686, %v1693
        %v1696 = vadd.f32 %v1687, %v1693
        %v1697 = vadd.f32 %v1695, %v341
        %v1698 = vadd.f32 %v1696, %v342
        %v1699 = vmax.f32 %v1697, 0.0
        %v1700 = vmax.f32 %v1698, 0.0
        %1701 = vst [vmem:[%s340] sm:$0xff] %v1699
        %1702 = vst [vmem:[%s340 + $0x8] sm:$0xff] %v1700
        %s1703 = sand.u32 %s186, 1
        %s1704 = scalar_lea.sflag [#allocation4], %s1703
        %s1705 = sand.u32 %s186, 1
        %s1706 = smul.addr %s1705, 16
        %s1707 = scalar_lea.vmem [#allocation10], %s1706
        // Predicated region
        $region65: #{tpu_custom_call.1} parent=47 // pred_check
          %p1708 = pneg %p196
        $region66: #{tpu_custom_call.1} parent=47 // pred_check_branch
          %1710 = sbr.rel (%p1708) target = $region68
        $region67: #{tpu_custom_call.1} parent=47 // pred_region
          %s1712 = ssub.s32 256, 256
          %1713 = vsyncadd %s1704, %s1712
          %s1714 = smul.addr %s26, 2
          %s1715 = smul.addr %s1714, 128
          %s1716 = scalar_lea.hbm %s7, %s1715
          %s1717 = sshll.u32 %s1707, 4
          %s1718 = int_to_ptr.vmem [resolvable:$true] %s1717
          %1723 = dma.vmem_to_hbm [thread:$0]  %s1718, 256, %s1716, %s1704, 128, 128, 8
        $region68: #{tpu_custom_call.1} parent=47 // pred_fallthru
          _
      $region48: #{tpu_custom_call.1} parent=5 // pred_fallthru
        _
      %p1724 = scmp.le.s32.totalorder 2, %s21
      // Predicated region
      $region69: #{tpu_custom_call.1} parent=5 // pred_check
        %p1725 = pneg %p1724
      $region70: #{tpu_custom_call.1} parent=5 // pred_check_branch
        %1727 = sbr.rel (%p1725) target = $region72
      $region71: #{tpu_custom_call.1} parent=5 // pred_region
        %s1728 = ssub.s32 %s21, 2
        // Predicated region
        $region73: #{tpu_custom_call.1} parent=71 // pred_check
          %p1729 = pneg %p202
        $region74: #{tpu_custom_call.1} parent=71 // pred_check_branch
          %1731 = sbr.rel (%p1729) target = $region76
        $region75: #{tpu_custom_call.1} parent=71 // pred_region
          %s1732 = sand.u32 %s187, 1
          %s1733 = scalar_lea.sflag [#allocation4], %s1732
          %s1734 = sand.u32 %s187, 1
          %s1735 = smul.addr %s1734, 16
          %s1736 = scalar_lea.vmem [#allocation10], %s1735
          %1737 = dma.done %s1733, 256
        $region76: #{tpu_custom_call.1} parent=71 // pred_fallthru
          _
      $region72: #{tpu_custom_call.1} parent=5 // pred_fallthru
        _
    $region6: #{tpu_custom_call.1} parent=1 // loop_footer
      %s25 = sadd.s32 1, %s21
    $region7: #{tpu_custom_call.1} parent=1 // loop_footer_branch
      %20 = sbr.rel target = $region3
    $region8: #{tpu_custom_call.1} parent=1 // loop_exit
      _
    %1738 = vsyncpa [#allocation3], 1
    %s1739 = scalar_lea.sflag [#allocation3], 1
    %1740 = vsyncpa %s1739, 1
    %1741 = vsyncpa [#allocation6], 1
    %1742 = vsyncpa [#allocation9], 1
    %1743 = vsyncpa [#allocation4], 1
    %s1744 = scalar_lea.sflag [#allocation4], 1
    %1745 = vsyncpa %s1744, 1

</llo_original>
